<compile_context>
chip_gen: v7x
topology: tpu7x:2x2x1
jax: 0.10.0
libtpu: 0.0.40
codegen_flags: <defaults>
</compile_context>

<pallas_src>
import random
from functools import partial

import jax
import jax.numpy as jnp
from jax.experimental import pallas as pl
from jax.experimental.pallas import tpu as pltpu


def _round_up(x, m):
    return (x + m - 1) // m * m


# ----------------------------- Pallas kernels ------------------------------ #

def _encoder_kernel(x_ref, wih_ref, whh_ref, b_ref,
                    h_out_ref, c_out_ref, h_sc, c_sc):
    """One grid step = one encoder timestep. h/c carried in VMEM scratch."""
    t = pl.program_id(0)

    @pl.when(t == 0)
    def _init():
        h_sc[...] = jnp.zeros_like(h_sc)
        c_sc[...] = jnp.zeros_like(c_sc)

    x = x_ref[...]                      # (B_pad, E_pad)
    h = h_sc[...]                       # (B_pad, H_pad)
    c = c_sc[...]                       # (B_pad, H_pad)
    gates = (jnp.dot(x, wih_ref[...], preferred_element_type=jnp.float32)
             + jnp.dot(h, whh_ref[...], preferred_element_type=jnp.float32)
             + b_ref[...])              # (B_pad, 4*H_pad), lane-aligned gate blocks
    HP = h_sc.shape[-1]
    i_g = jax.nn.sigmoid(gates[:, 0 * HP:1 * HP])
    f_g = jax.nn.sigmoid(gates[:, 1 * HP:2 * HP])
    g_g = jnp.tanh(gates[:, 2 * HP:3 * HP])
    o_g = jax.nn.sigmoid(gates[:, 3 * HP:4 * HP])
    c_new = f_g * c + i_g * g_g
    h_new = o_g * jnp.tanh(c_new)
    h_sc[...] = h_new
    c_sc[...] = c_new

    @pl.when(t == pl.num_programs(0) - 1)
    def _final():
        h_out_ref[...] = h_new
        c_out_ref[...] = c_new


def _decoder_kernel(tf_ref,                                   # scalar prefetch (SMEM)
                    tgt_ref, emb_ref, wih_ref, whh_ref, b_ref,
                    fcw_ref, fcb_ref, h0_ref, c0_ref,
                    logits_ref,
                    h_sc, c_sc, tok_sc):
    """One grid step = one decoder timestep: embed -> LSTM -> vocab proj -> argmax."""
    s = pl.program_id(0)

    @pl.when(s == 0)
    def _init():
        h_sc[...] = h0_ref[...]
        c_sc[...] = c0_ref[...]
        tok_sc[...] = jnp.zeros_like(tok_sc)

    # --- token selection: target[s] (teacher forcing / first step) vs prev argmax ---
    use_tf = jnp.logical_or(s == 0, tf_ref[s] != 0)
    tokens = jnp.where(use_tf, tgt_ref[...], tok_sc[...])    # (B_pad, 1) int32

    # --- embedding gather as a one-hot matmul (MXU, no dynamic scalar gather) ---
    n_rows = emb_ref.shape[0]
    col = jax.lax.broadcasted_iota(jnp.int32, (tokens.shape[0], n_rows), 1)
    onehot = (tokens == col).astype(jnp.float32)              # (B_pad, n_rows)
    x = jnp.dot(onehot, emb_ref[...], preferred_element_type=jnp.float32)

    # --- LSTM cell (PyTorch gate order i, f, g, o) ---
    h = h_sc[...]
    c = c_sc[...]
    gates = (jnp.dot(x, wih_ref[...], preferred_element_type=jnp.float32)
             + jnp.dot(h, whh_ref[...], preferred_element_type=jnp.float32)
             + b_ref[...])
    HP = h_sc.shape[-1]
    i_g = jax.nn.sigmoid(gates[:, 0 * HP:1 * HP])
    f_g = jax.nn.sigmoid(gates[:, 1 * HP:2 * HP])
    g_g = jnp.tanh(gates[:, 2 * HP:3 * HP])
    o_g = jax.nn.sigmoid(gates[:, 3 * HP:4 * HP])
    c_new = f_g * c + i_g * g_g
    h_new = o_g * jnp.tanh(c_new)
    h_sc[...] = h_new
    c_sc[...] = c_new

    # --- fused vocab projection (padded vocab cols carry bias -1e30) ---
    logits = (jnp.dot(h_new, fcw_ref[...], preferred_element_type=jnp.float32)
              + fcb_ref[...])                                  # (B_pad, V_pad)
    logits_ref[...] = logits

    # --- in-kernel argmax (first max index), kept 2-D (B_pad, 1) for clean layout ---
    vcol = jax.lax.broadcasted_iota(jnp.int32, logits.shape, 1).astype(jnp.float32)
    max_val = jnp.max(logits, axis=1, keepdims=True)
    cand = jnp.where(logits == max_val, vcol, float(logits.shape[1]))
    tok_sc[...] = jnp.min(cand, axis=1, keepdims=True).astype(jnp.int32)


# ------------------------------ pallas wrappers ----------------------------- #

def _encoder_pallas(x_all, wih, whh, b):
    src_len, B_pad, _ = x_all.shape
    H_pad = whh.shape[0]
    return pl.pallas_call(
        _encoder_kernel,
        out_shape=(jax.ShapeDtypeStruct((B_pad, H_pad), jnp.float32),
                   jax.ShapeDtypeStruct((B_pad, H_pad), jnp.float32)),
        grid_spec=pltpu.PrefetchScalarGridSpec(
            num_scalar_prefetch=0,
            grid=(src_len,),
            in_specs=[
                pl.BlockSpec((None, B_pad, x_all.shape[2]), lambda t: (t, 0, 0)),
                pl.BlockSpec(wih.shape, lambda t: (0, 0)),   # resident weights
                pl.BlockSpec(whh.shape, lambda t: (0, 0)),
                pl.BlockSpec(b.shape, lambda t: (0, 0)),
            ],
            out_specs=(pl.BlockSpec((B_pad, H_pad), lambda t: (0, 0)),
                       pl.BlockSpec((B_pad, H_pad), lambda t: (0, 0))),
            scratch_shapes=[pltpu.VMEM((B_pad, H_pad), jnp.float32),
                            pltpu.VMEM((B_pad, H_pad), jnp.float32)],
        ),
        compiler_params=pltpu.CompilerParams(dimension_semantics=("arbitrary",)),
    )(x_all, wih, whh, b)


def _decoder_pallas(tf_flags, tgt_pad, emb, wih, whh, b, fcw, fcb, h0, c0):
    trg_len = tgt_pad.shape[0]
    B_pad, H_pad = h0.shape
    V_pad = fcw.shape[1]
    n_steps = trg_len - 1
    return pl.pallas_call(
        _decoder_kernel,
        out_shape=jax.ShapeDtypeStruct((n_steps, B_pad, V_pad), jnp.float32),
        grid_spec=pltpu.PrefetchScalarGridSpec(
            num_scalar_prefetch=1,                      # tf_flags -> SMEM
            grid=(n_steps,),
            in_specs=[
                pl.BlockSpec((None, B_pad, 1), lambda s, tf: (s, 0, 0)),   # target[s]
                pl.BlockSpec(emb.shape, lambda s, tf: (0, 0)),             # resident
                pl.BlockSpec(wih.shape, lambda s, tf: (0, 0)),
                pl.BlockSpec(whh.shape, lambda s, tf: (0, 0)),
                pl.BlockSpec(b.shape, lambda s, tf: (0, 0)),
                pl.BlockSpec(fcw.shape, lambda s, tf: (0, 0)),
                pl.BlockSpec(fcb.shape, lambda s, tf: (0, 0)),
                pl.BlockSpec((B_pad, H_pad), lambda s, tf: (0, 0)),        # h0
                pl.BlockSpec((B_pad, H_pad), lambda s, tf: (0, 0)),        # c0
            ],
            out_specs=pl.BlockSpec((None, B_pad, V_pad), lambda s, tf: (s, 0, 0)),
            scratch_shapes=[pltpu.VMEM((B_pad, H_pad), jnp.float32),   # h carry
                            pltpu.VMEM((B_pad, H_pad), jnp.float32),   # c carry
                            pltpu.VMEM((B_pad, 1), jnp.int32)],        # prev argmax
        ),
        compiler_params=pltpu.CompilerParams(dimension_semantics=("arbitrary",)),
    )(tf_flags, tgt_pad, emb, wih, whh, b, fcw, fcb, h0, c0)


# --------------------------------- params ----------------------------------- #

def init_params(key, src_vocab, trg_vocab, emb_dim, hidden):
    """Real parameters (PyTorch-equivalent), pre-padded to TPU-friendly shapes.
    Weight matrices are stored transposed as (in_features, 4*H_pad) so kernels do x @ W."""
    ks = jax.random.split(key, 10)
    s = 0.1
    f32 = jnp.float32
    E_pad = _round_up(emb_dim, 128)
    H_pad = _round_up(hidden, 128)
    V_pad = _round_up(trg_vocab, 128)
    TV_pad = _round_up(trg_vocab, 8)

    def nrm(k, shp):
        return s * jax.random.normal(k, shp, f32)

    enc_emb = nrm(ks[0], (src_vocab, emb_dim))
    enc_wih = nrm(ks[1], (emb_dim, 4 * hidden))
    enc_whh = nrm(ks[2], (hidden, 4 * hidden))
    enc_b = nrm(ks[3], (1, 4 * hidden))
    dec_emb = nrm(ks[4], (trg_vocab, emb_dim))
    dec_wih = nrm(ks[5], (emb_dim, 4 * hidden))
    dec_whh = nrm(ks[6], (hidden, 4 * hidden))
    dec_b = nrm(ks[7], (1, 4 * hidden))
    fc_w = nrm(ks[8], (hidden, trg_vocab))
    fc_b = nrm(ks[9], (1, trg_vocab))

    def pad2(a, r, c):
        return jnp.zeros((r, c), a.dtype).at[:a.shape[0], :a.shape[1]].set(a)

    def pad_gates(w, rows_pad):
        # (in, 4H) -> (rows_pad, 4*H_pad); each gate block lands at k*H_pad (lane-aligned).
        out = jnp.zeros((rows_pad, 4 * H_pad), f32)
        for k in range(4):
            out = out.at[:w.shape[0], k * H_pad:k * H_pad + hidden].set(
                w[:, k * hidden:(k + 1) * hidden])
        return out

    def pad_gate_bias(b):
        out = jnp.zeros((1, 4 * H_pad), f32)
        for k in range(4):
            out = out.at[:, k * H_pad:k * H_pad + hidden].set(
                b[:, k * hidden:(k + 1) * hidden])
        return out

    return {
        "enc_emb":   pad2(enc_emb, src_vocab, E_pad),
        "enc_wih_t": pad_gates(enc_wih, E_pad),
        "enc_whh_t": pad_gates(enc_whh, H_pad),
        "enc_b":     pad_gate_bias(enc_b),
        "dec_emb":   pad2(dec_emb, TV_pad, E_pad),
        "dec_wih_t": pad_gates(dec_wih, E_pad),
        "dec_whh_t": pad_gates(dec_whh, H_pad),
        "dec_b":     pad_gate_bias(dec_b),
        "fc_w_t":    pad2(fc_w, H_pad, V_pad),
        # padded vocab columns get -1e30 so in-kernel argmax never selects them
        "fc_b":      jnp.full((1, V_pad), -1e30, f32).at[:, :trg_vocab].set(fc_b),
    }


# ------------------------------- forward pass -------------------------------- #

@partial(jax.jit, static_argnames=("trg_vocab",))
def seq2seq_forward(params, source, target, tf_flags, trg_vocab):
    """Mirrors Seq2Seq.forward: (trg_len, batch, trg_vocab) logits, outputs[0] == 0."""
    src_len, B = source.shape
    trg_len, _ = target.shape
    B_pad = _round_up(B, 8)

    # pad token arrays over batch (pad rows use token 0; sliced off at the end)
    src_pad = jnp.zeros((src_len, B_pad), jnp.int32).at[:, :B].set(source)
    tgt_pad = jnp.zeros((trg_len, B_pad, 1), jnp.int32).at[:, :B, 0].set(target)

    # encoder: one gather for all timesteps, then one fused pallas_call over time
    x_all = jnp.take(params["enc_emb"], src_pad, axis=0)       # (src_len, B_pad, E_pad)
    h0, c0 = _encoder_pallas(x_all, params["enc_wih_t"],
                             params["enc_whh_t"], params["enc_b"])

    # decoder: one fused pallas_call over time (embed + LSTM + FC + argmax per step)
    logits = _decoder_pallas(tf_flags, tgt_pad, params["dec_emb"],
                             params["dec_wih_t"], params["dec_whh_t"], params["dec_b"],
                             params["fc_w_t"], params["fc_b"], h0, c0)

    logits = logits[:, :B, :trg_vocab]                         # strip padding
    zeros0 = jnp.zeros((1, B, trg_vocab), jnp.float32)
    return jnp.concatenate([zeros0, logits], axis=0)           # outputs[0] == 0


# ---------------------------------- main ------------------------------------- #

if __name__ == "__main__":
    SRC_VOCAB, TRG_VOCAB = 16, 16
    EMB, HIDDEN = 32, 32
    SRC_LEN, TRG_LEN, BATCH = 8, 8, 2

    key = jax.random.PRNGKey(0)
    k_par, k_src, k_trg = jax.random.split(key, 3)

    params = init_params(k_par, SRC_VOCAB, TRG_VOCAB, EMB, HIDDEN)
    source = jax.random.randint(k_src, (SRC_LEN, BATCH), 0, SRC_VOCAB, jnp.int32)
    target = jax.random.randint(k_trg, (TRG_LEN, BATCH), 0, TRG_VOCAB, jnp.int32)

    # Host-side stand-in for torch's per-step `random.random() < teacher_force_ratio`,
    # passed as data so the TF pattern is not baked into the compiled graph.
    rng = random.Random(0)
    tf_host = [0] + [1 if rng.random() < 0.5 else 0 for _ in range(1, TRG_LEN)]
    tf_flags = jnp.asarray(tf_host, jnp.int32)

    out = seq2seq_forward(params, source, target, tf_flags, TRG_VOCAB)
    out = jax.block_until_ready(out)

    assert out.shape == (TRG_LEN, BATCH, TRG_VOCAB), out.shape
    assert bool(jnp.all(jnp.isfinite(out)))
    assert bool(jnp.all(out[0] == 0.0))   # outputs[0] untouched, as in reference
    print("KERNEL_OK")
</pallas_src>

<mosaic_0001>
module attributes {stable_mosaic.version = 11 : i64} {
  func.func @_encoder_kernel(%arg0: i32, %arg1: memref<1x8x128xf32, #tpu.memory_space<vmem>>, %arg2: memref<128x512xf32, #tpu.memory_space<vmem>>, %arg3: memref<128x512xf32, #tpu.memory_space<vmem>>, %arg4: memref<1x512xf32, #tpu.memory_space<vmem>>, %arg5: memref<8x128xf32, #tpu.memory_space<vmem>>, %arg6: memref<8x128xf32, #tpu.memory_space<vmem>>, %arg7: memref<8x128xf32, #tpu.memory_space<vmem>>, %arg8: memref<8x128xf32, #tpu.memory_space<vmem>>) attributes {dimension_semantics = [#tpu.dimension_semantics<arbitrary>], iteration_bounds = array<i64: 8>, scalar_prefetch = 0 : i64, scratch_operands = 2 : i64, tpu.core_type = #tpu.core_type<tc>, window_params = [{transform_indices = @transform_0, window_bounds = array<i64: 1, 8, 128>}, {pipeline_mode = #tpu.pipeline_mode<synchronous>, transform_indices = @transform_1, window_bounds = array<i64: 128, 512>}, {pipeline_mode = #tpu.pipeline_mode<synchronous>, transform_indices = @transform_2, window_bounds = array<i64: 128, 512>}, {pipeline_mode = #tpu.pipeline_mode<synchronous>, transform_indices = @transform_3, window_bounds = array<i64: 1, 512>}, {pipeline_mode = #tpu.pipeline_mode<synchronous>, transform_indices = @transform_4, window_bounds = array<i64: 8, 128>}, {pipeline_mode = #tpu.pipeline_mode<synchronous>, transform_indices = @transform_5, window_bounds = array<i64: 8, 128>}]} {
    %c0_i32 = arith.constant 0 : i32
    %0 = arith.cmpi eq, %arg0, %c0_i32 : i32
    %1 = arith.extui %0 : i1 to i32
    %c0_i32_0 = arith.constant 0 : i32
    %2 = arith.cmpi ne, %1, %c0_i32_0 : i32
    scf.if %2 {
      %cst_22 = arith.constant 0.000000e+00 : f32
      %45 = vector.broadcast %cst_22 : f32 to vector<8x128xf32>
      %c0_23 = arith.constant 0 : index
      %c0_24 = arith.constant 0 : index
      %46 = vector.load %arg7[%c0_23, %c0_24] : memref<8x128xf32, #tpu.memory_space<vmem>>, vector<8x128xf32>
      tpu.vector_store %arg7[%c0_23, %c0_24], %45 {strides = array<i32>} : memref<8x128xf32, #tpu.memory_space<vmem>>, vector<8x128xf32>,
      %cst_25 = arith.constant 0.000000e+00 : f32
      %47 = vector.broadcast %cst_25 : f32 to vector<8x128xf32>
      %c0_26 = arith.constant 0 : index
      %c0_27 = arith.constant 0 : index
      %48 = vector.load %arg8[%c0_26, %c0_27] : memref<8x128xf32, #tpu.memory_space<vmem>>, vector<8x128xf32>
      tpu.vector_store %arg8[%c0_26, %c0_27], %47 {strides = array<i32>} : memref<8x128xf32, #tpu.memory_space<vmem>>, vector<8x128xf32>,
    } else {
    }
    %c0 = arith.constant 0 : index
    %c0_1 = arith.constant 0 : index
    %c0_2 = arith.constant 0 : index
    %3 = vector.load %arg1[%c0, %c0_1, %c0_2] : memref<1x8x128xf32, #tpu.memory_space<vmem>>, vector<1x8x128xf32>
    %4 = vector.shape_cast %3 : vector<1x8x128xf32> to vector<8x128xf32>
    %c0_3 = arith.constant 0 : index
    %c0_4 = arith.constant 0 : index
    %5 = vector.load %arg7[%c0_3, %c0_4] : memref<8x128xf32, #tpu.memory_space<vmem>>, vector<8x128xf32>
    %c0_5 = arith.constant 0 : index
    %c0_6 = arith.constant 0 : index
    %6 = vector.load %arg8[%c0_5, %c0_6] : memref<8x128xf32, #tpu.memory_space<vmem>>, vector<8x128xf32>
    %c0_7 = arith.constant 0 : index
    %c0_8 = arith.constant 0 : index
    %7 = vector.load %arg2[%c0_7, %c0_8] : memref<128x512xf32, #tpu.memory_space<vmem>>, vector<128x512xf32>
    %cst = arith.constant dense<0.000000e+00> : vector<8x512xf32>
    %8 = tpu.matmul %4, %7, %cst {dimension_numbers = #tpu.dot_dimension_numbers<[1], [0], [0], [1], [0, 0, 1, 1], [], []>} : vector<8x128xf32>, vector<128x512xf32>, vector<8x512xf32> -> vector<8x512xf32>
    %c0_9 = arith.constant 0 : index
    %c0_10 = arith.constant 0 : index
    %9 = vector.load %arg3[%c0_9, %c0_10] : memref<128x512xf32, #tpu.memory_space<vmem>>, vector<128x512xf32>
    %cst_11 = arith.constant dense<0.000000e+00> : vector<8x512xf32>
    %10 = tpu.matmul %5, %9, %cst_11 {dimension_numbers = #tpu.dot_dimension_numbers<[1], [0], [0], [1], [0, 0, 1, 1], [], []>} : vector<8x128xf32>, vector<128x512xf32>, vector<8x512xf32> -> vector<8x512xf32>
    %11 = arith.addf %8, %10 : vector<8x512xf32>
    %c0_12 = arith.constant 0 : index
    %c0_13 = arith.constant 0 : index
    %12 = vector.load %arg4[%c0_12, %c0_13] : memref<1x512xf32, #tpu.memory_space<vmem>>, vector<1x512xf32>
    %13 = vector.broadcast %12 : vector<1x512xf32> to vector<8x512xf32>
    %14 = arith.addf %11, %13 : vector<8x512xf32>
    %15 = vector.extract_strided_slice %14 {offsets = [0, 0], sizes = [8, 128], strides = [1, 1]} : vector<8x512xf32> to vector<8x128xf32>
    %16 = arith.negf %15 : vector<8x128xf32>
    %17 = math.exp %16 : vector<8x128xf32>
    %cst_14 = arith.constant 1.000000e+00 : f32
    %18 = vector.broadcast %cst_14 : f32 to vector<8x128xf32>
    %19 = arith.addf %18, %17 : vector<8x128xf32>
    %20 = arith.divf %18, %19 : vector<8x128xf32>
    %21 = vector.extract_strided_slice %14 {offsets = [0, 128], sizes = [8, 128], strides = [1, 1]} : vector<8x512xf32> to vector<8x128xf32>
    %22 = arith.negf %21 : vector<8x128xf32>
    %23 = math.exp %22 : vector<8x128xf32>
    %cst_15 = arith.constant 1.000000e+00 : f32
    %24 = vector.broadcast %cst_15 : f32 to vector<8x128xf32>
    %25 = arith.addf %24, %23 : vector<8x128xf32>
    %26 = arith.divf %24, %25 : vector<8x128xf32>
    %27 = vector.extract_strided_slice %14 {offsets = [0, 256], sizes = [8, 128], strides = [1, 1]} : vector<8x512xf32> to vector<8x128xf32>
    %28 = math.tanh %27 : vector<8x128xf32>
    %29 = vector.extract_strided_slice %14 {offsets = [0, 384], sizes = [8, 128], strides = [1, 1]} : vector<8x512xf32> to vector<8x128xf32>
    %30 = arith.negf %29 : vector<8x128xf32>
    %31 = math.exp %30 : vector<8x128xf32>
    %cst_16 = arith.constant 1.000000e+00 : f32
    %32 = vector.broadcast %cst_16 : f32 to vector<8x128xf32>
    %33 = arith.addf %32, %31 : vector<8x128xf32>
    %34 = arith.divf %32, %33 : vector<8x128xf32>
    %35 = arith.mulf %26, %6 : vector<8x128xf32>
    %36 = arith.mulf %20, %28 : vector<8x128xf32>
    %37 = arith.addf %35, %36 : vector<8x128xf32>
    %38 = math.tanh %37 : vector<8x128xf32>
    %39 = arith.mulf %34, %38 : vector<8x128xf32>
    %c0_17 = arith.constant 0 : index
    %c0_18 = arith.constant 0 : index
    %40 = vector.load %arg7[%c0_17, %c0_18] : memref<8x128xf32, #tpu.memory_space<vmem>>, vector<8x128xf32>
    tpu.vector_store %arg7[%c0_17, %c0_18], %39 {strides = array<i32>} : memref<8x128xf32, #tpu.memory_space<vmem>>, vector<8x128xf32>,
    %c0_19 = arith.constant 0 : index
    %c0_20 = arith.constant 0 : index
    %41 = vector.load %arg8[%c0_19, %c0_20] : memref<8x128xf32, #tpu.memory_space<vmem>>, vector<8x128xf32>
    tpu.vector_store %arg8[%c0_19, %c0_20], %37 {strides = array<i32>} : memref<8x128xf32, #tpu.memory_space<vmem>>, vector<8x128xf32>,
    %c7_i32 = arith.constant 7 : i32
    %42 = arith.cmpi eq, %arg0, %c7_i32 : i32
    %43 = arith.extui %42 : i1 to i32
    %c0_i32_21 = arith.constant 0 : i32
    %44 = arith.cmpi ne, %43, %c0_i32_21 : i32
    scf.if %44 {
      %c0_22 = arith.constant 0 : index
      %c0_23 = arith.constant 0 : index
      %45 = vector.load %arg5[%c0_22, %c0_23] : memref<8x128xf32, #tpu.memory_space<vmem>>, vector<8x128xf32>
      tpu.vector_store %arg5[%c0_22, %c0_23], %39 {strides = array<i32>} : memref<8x128xf32, #tpu.memory_space<vmem>>, vector<8x128xf32>,
      %c0_24 = arith.constant 0 : index
      %c0_25 = arith.constant 0 : index
      %46 = vector.load %arg6[%c0_24, %c0_25] : memref<8x128xf32, #tpu.memory_space<vmem>>, vector<8x128xf32>
      tpu.vector_store %arg6[%c0_24, %c0_25], %37 {strides = array<i32>} : memref<8x128xf32, #tpu.memory_space<vmem>>, vector<8x128xf32>,
    } else {
    }
    return
  }
  func.func @transform_0(%arg0: i32) -> (i32, i32, i32) {
    %c0_i32 = arith.constant 0 : i32
    %c0_i32_0 = arith.constant 0 : i32
    %c0_i32_1 = arith.constant 0 : i32
    return %arg0, %c0_i32, %c0_i32_0 : i32, i32, i32
  }
  func.func @transform_1(%arg0: i32) -> (i32, i32) {
    %c0_i32 = arith.constant 0 : i32
    %c0_i32_0 = arith.constant 0 : i32
    %c0_i32_1 = arith.constant 0 : i32
    return %c0_i32, %c0_i32_0 : i32, i32
  }
  func.func @transform_2(%arg0: i32) -> (i32, i32) {
    %c0_i32 = arith.constant 0 : i32
    %c0_i32_0 = arith.constant 0 : i32
    %c0_i32_1 = arith.constant 0 : i32
    return %c0_i32, %c0_i32_0 : i32, i32
  }
  func.func @transform_3(%arg0: i32) -> (i32, i32) {
    %c0_i32 = arith.constant 0 : i32
    %c0_i32_0 = arith.constant 0 : i32
    %c0_i32_1 = arith.constant 0 : i32
    return %c0_i32, %c0_i32_0 : i32, i32
  }
  func.func @transform_4(%arg0: i32) -> (i32, i32) {
    %c0_i32 = arith.constant 0 : i32
    %c0_i32_0 = arith.constant 0 : i32
    %c0_i32_1 = arith.constant 0 : i32
    return %c0_i32, %c0_i32_0 : i32, i32
  }
  func.func @transform_5(%arg0: i32) -> (i32, i32) {
    %c0_i32 = arith.constant 0 : i32
    %c0_i32_0 = arith.constant 0 : i32
    %c0_i32_1 = arith.constant 0 : i32
    return %c0_i32, %c0_i32_0 : i32, i32
  }
}

module attributes {stable_mosaic.version = 11 : i64} {
  func.func @_decoder_kernel(%arg0: i32, %arg1: memref<8xi32, #tpu.memory_space<smem>>, %arg2: memref<1x8x1xi32, #tpu.memory_space<vmem>>, %arg3: memref<16x128xf32, #tpu.memory_space<vmem>>, %arg4: memref<128x512xf32, #tpu.memory_space<vmem>>, %arg5: memref<128x512xf32, #tpu.memory_space<vmem>>, %arg6: memref<1x512xf32, #tpu.memory_space<vmem>>, %arg7: memref<128x128xf32, #tpu.memory_space<vmem>>, %arg8: memref<1x128xf32, #tpu.memory_space<vmem>>, %arg9: memref<8x128xf32, #tpu.memory_space<vmem>>, %arg10: memref<8x128xf32, #tpu.memory_space<vmem>>, %arg11: memref<1x8x128xf32, #tpu.memory_space<vmem>>, %arg12: memref<8x128xf32, #tpu.memory_space<vmem>>, %arg13: memref<8x128xf32, #tpu.memory_space<vmem>>, %arg14: memref<8x1xi32, #tpu.memory_space<vmem>>) attributes {dimension_semantics = [#tpu.dimension_semantics<arbitrary>], iteration_bounds = array<i64: 7>, scalar_prefetch = 1 : i64, scratch_operands = 3 : i64, tpu.core_type = #tpu.core_type<tc>, window_params = [{transform_indices = @transform_0, window_bounds = array<i64: 1, 8, 1>}, {pipeline_mode = #tpu.pipeline_mode<synchronous>, transform_indices = @transform_1, window_bounds = array<i64: 16, 128>}, {pipeline_mode = #tpu.pipeline_mode<synchronous>, transform_indices = @transform_2, window_bounds = array<i64: 128, 512>}, {pipeline_mode = #tpu.pipeline_mode<synchronous>, transform_indices = @transform_3, window_bounds = array<i64: 128, 512>}, {pipeline_mode = #tpu.pipeline_mode<synchronous>, transform_indices = @transform_4, window_bounds = array<i64: 1, 512>}, {pipeline_mode = #tpu.pipeline_mode<synchronous>, transform_indices = @transform_5, window_bounds = array<i64: 128, 128>}, {pipeline_mode = #tpu.pipeline_mode<synchronous>, transform_indices = @transform_6, window_bounds = array<i64: 1, 128>}, {pipeline_mode = #tpu.pipeline_mode<synchronous>, transform_indices = @transform_7, window_bounds = array<i64: 8, 128>}, {pipeline_mode = #tpu.pipeline_mode<synchronous>, transform_indices = @transform_8, window_bounds = array<i64: 8, 128>}, {transform_indices = @transform_9, window_bounds = array<i64: 1, 8, 128>}]} {
    %c0_i32 = arith.constant 0 : i32
    %0 = arith.cmpi eq, %arg0, %c0_i32 : i32
    %1 = arith.extui %0 : i1 to i32
    %c0_i32_0 = arith.constant 0 : i32
    %2 = arith.cmpi ne, %1, %c0_i32_0 : i32
    scf.if %2 {
      %c0_41 = arith.constant 0 : index
      %c0_42 = arith.constant 0 : index
      %76 = vector.load %arg9[%c0_41, %c0_42] : memref<8x128xf32, #tpu.memory_space<vmem>>, vector<8x128xf32>
      %c0_43 = arith.constant 0 : index
      %c0_44 = arith.constant 0 : index
      %77 = vector.load %arg12[%c0_43, %c0_44] : memref<8x128xf32, #tpu.memory_space<vmem>>, vector<8x128xf32>
      tpu.vector_store %arg12[%c0_43, %c0_44], %76 {strides = array<i32>} : memref<8x128xf32, #tpu.memory_space<vmem>>, vector<8x128xf32>,
      %c0_45 = arith.constant 0 : index
      %c0_46 = arith.constant 0 : index
      %78 = vector.load %arg10[%c0_45, %c0_46] : memref<8x128xf32, #tpu.memory_space<vmem>>, vector<8x128xf32>
      %c0_47 = arith.constant 0 : index
      %c0_48 = arith.constant 0 : index
      %79 = vector.load %arg13[%c0_47, %c0_48] : memref<8x128xf32, #tpu.memory_space<vmem>>, vector<8x128xf32>
      tpu.vector_store %arg13[%c0_47, %c0_48], %78 {strides = array<i32>} : memref<8x128xf32, #tpu.memory_space<vmem>>, vector<8x128xf32>,
      %c0_i32_49 = arith.constant 0 : i32
      %80 = vector.broadcast %c0_i32_49 : i32 to vector<8x1xi32>
      %c0_50 = arith.constant 0 : index
      %c0_51 = arith.constant 0 : index
      %81 = vector.load %arg14[%c0_50, %c0_51] : memref<8x1xi32, #tpu.memory_space<vmem>>, vector<8x1xi32>
      tpu.vector_store %arg14[%c0_50, %c0_51], %80 {strides = array<i32>} : memref<8x1xi32, #tpu.memory_space<vmem>>, vector<8x1xi32>,
    } else {
    }
    %c0_i32_1 = arith.constant 0 : i32
    %3 = arith.cmpi eq, %arg0, %c0_i32_1 : i32
    %4 = arith.index_cast %arg0 : i32 to index
    %5 = memref.load %arg1[%4] : memref<8xi32, #tpu.memory_space<smem>>
    %c0_i32_2 = arith.constant 0 : i32
    %6 = arith.cmpi ne, %5, %c0_i32_2 : i32
    %7 = arith.ori %3, %6 : i1
    %c0 = arith.constant 0 : index
    %c0_3 = arith.constant 0 : index
    %c0_4 = arith.constant 0 : index
    %8 = vector.load %arg2[%c0, %c0_3, %c0_4] : memref<1x8x1xi32, #tpu.memory_space<vmem>>, vector<1x8x1xi32>
    %9 = vector.shape_cast %8 : vector<1x8x1xi32> to vector<8x1xi32>
    %c0_5 = arith.constant 0 : index
    %c0_6 = arith.constant 0 : index
    %10 = vector.load %arg14[%c0_5, %c0_6] : memref<8x1xi32, #tpu.memory_space<vmem>>, vector<8x1xi32>
    %11 = arith.select %7, %9, %10 : vector<8x1xi32>
    %12 = tpu.iota {dimensions = array<i32: 1>} : vector<8x16xi32>
    %13 = vector.broadcast %11 : vector<8x1xi32> to vector<8x16xi32>
    %14 = arith.cmpi eq, %13, %12 : vector<8x16xi32>
    %15 = arith.extui %14 : vector<8x16xi1> to vector<8x16xi32>
    %16 = arith.sitofp %15 : vector<8x16xi32> to vector<8x16xf32>
    %c0_7 = arith.constant 0 : index
    %c0_8 = arith.constant 0 : index
    %17 = vector.load %arg3[%c0_7, %c0_8] : memref<16x128xf32, #tpu.memory_space<vmem>>, vector<16x128xf32>
    %cst = arith.constant dense<0.000000e+00> : vector<8x128xf32>
    %18 = tpu.matmul %16, %17, %cst {dimension_numbers = #tpu.dot_dimension_numbers<[1], [0], [0], [1], [0, 0, 1, 1], [], []>} : vector<8x16xf32>, vector<16x128xf32>, vector<8x128xf32> -> vector<8x128xf32>
    %c0_9 = arith.constant 0 : index
    %c0_10 = arith.constant 0 : index
    %19 = vector.load %arg12[%c0_9, %c0_10] : memref<8x128xf32, #tpu.memory_space<vmem>>, vector<8x128xf32>
    %c0_11 = arith.constant 0 : index
    %c0_12 = arith.constant 0 : index
    %20 = vector.load %arg13[%c0_11, %c0_12] : memref<8x128xf32, #tpu.memory_space<vmem>>, vector<8x128xf32>
    %c0_13 = arith.constant 0 : index
    %c0_14 = arith.constant 0 : index
    %21 = vector.load %arg4[%c0_13, %c0_14] : memref<128x512xf32, #tpu.memory_space<vmem>>, vector<128x512xf32>
    %cst_15 = arith.constant dense<0.000000e+00> : vector<8x512xf32>
    %22 = tpu.matmul %18, %21, %cst_15 {dimension_numbers = #tpu.dot_dimension_numbers<[1], [0], [0], [1], [0, 0, 1, 1], [], []>} : vector<8x128xf32>, vector<128x512xf32>, vector<8x512xf32> -> vector<8x512xf32>
    %c0_16 = arith.constant 0 : index
    %c0_17 = arith.constant 0 : index
    %23 = vector.load %arg5[%c0_16, %c0_17] : memref<128x512xf32, #tpu.memory_space<vmem>>, vector<128x512xf32>
    %cst_18 = arith.constant dense<0.000000e+00> : vector<8x512xf32>
    %24 = tpu.matmul %19, %23, %cst_18 {dimension_numbers = #tpu.dot_dimension_numbers<[1], [0], [0], [1], [0, 0, 1, 1], [], []>} : vector<8x128xf32>, vector<128x512xf32>, vector<8x512xf32> -> vector<8x512xf32>
    %25 = arith.addf %22, %24 : vector<8x512xf32>
    %c0_19 = arith.constant 0 : index
    %c0_20 = arith.constant 0 : index
    %26 = vector.load %arg6[%c0_19, %c0_20] : memref<1x512xf32, #tpu.memory_space<vmem>>, vector<1x512xf32>
    %27 = vector.broadcast %26 : vector<1x512xf32> to vector<8x512xf32>
    %28 = arith.addf %25, %27 : vector<8x512xf32>
    %29 = vector.extract_strided_slice %28 {offsets = [0, 0], sizes = [8, 128], strides = [1, 1]} : vector<8x512xf32> to vector<8x128xf32>
    %30 = arith.negf %29 : vector<8x128xf32>
    %31 = math.exp %30 : vector<8x128xf32>
    %cst_21 = arith.constant 1.000000e+00 : f32
    %32 = vector.broadcast %cst_21 : f32 to vector<8x128xf32>
    %33 = arith.addf %32, %31 : vector<8x128xf32>
    %34 = arith.divf %32, %33 : vector<8x128xf32>
    %35 = vector.extract_strided_slice %28 {offsets = [0, 128], sizes = [8, 128], strides = [1, 1]} : vector<8x512xf32> to vector<8x128xf32>
    %36 = arith.negf %35 : vector<8x128xf32>
    %37 = math.exp %36 : vector<8x128xf32>
    %cst_22 = arith.constant 1.000000e+00 : f32
    %38 = vector.broadcast %cst_22 : f32 to vector<8x128xf32>
    %39 = arith.addf %38, %37 : vector<8x128xf32>
    %40 = arith.divf %38, %39 : vector<8x128xf32>
    %41 = vector.extract_strided_slice %28 {offsets = [0, 256], sizes = [8, 128], strides = [1, 1]} : vector<8x512xf32> to vector<8x128xf32>
    %42 = math.tanh %41 : vector<8x128xf32>
    %43 = vector.extract_strided_slice %28 {offsets = [0, 384], sizes = [8, 128], strides = [1, 1]} : vector<8x512xf32> to vector<8x128xf32>
    %44 = arith.negf %43 : vector<8x128xf32>
    %45 = math.exp %44 : vector<8x128xf32>
    %cst_23 = arith.constant 1.000000e+00 : f32
    %46 = vector.broadcast %cst_23 : f32 to vector<8x128xf32>
    %47 = arith.addf %46, %45 : vector<8x128xf32>
    %48 = arith.divf %46, %47 : vector<8x128xf32>
    %49 = arith.mulf %40, %20 : vector<8x128xf32>
    %50 = arith.mulf %34, %42 : vector<8x128xf32>
    %51 = arith.addf %49, %50 : vector<8x128xf32>
    %52 = math.tanh %51 : vector<8x128xf32>
    %53 = arith.mulf %48, %52 : vector<8x128xf32>
    %c0_24 = arith.constant 0 : index
    %c0_25 = arith.constant 0 : index
    %54 = vector.load %arg12[%c0_24, %c0_25] : memref<8x128xf32, #tpu.memory_space<vmem>>, vector<8x128xf32>
    tpu.vector_store %arg12[%c0_24, %c0_25], %53 {strides = array<i32>} : memref<8x128xf32, #tpu.memory_space<vmem>>, vector<8x128xf32>,
    %c0_26 = arith.constant 0 : index
    %c0_27 = arith.constant 0 : index
    %55 = vector.load %arg13[%c0_26, %c0_27] : memref<8x128xf32, #tpu.memory_space<vmem>>, vector<8x128xf32>
    tpu.vector_store %arg13[%c0_26, %c0_27], %51 {strides = array<i32>} : memref<8x128xf32, #tpu.memory_space<vmem>>, vector<8x128xf32>,
    %c0_28 = arith.constant 0 : index
    %c0_29 = arith.constant 0 : index
    %56 = vector.load %arg7[%c0_28, %c0_29] : memref<128x128xf32, #tpu.memory_space<vmem>>, vector<128x128xf32>
    %cst_30 = arith.constant dense<0.000000e+00> : vector<8x128xf32>
    %57 = tpu.matmul %53, %56, %cst_30 {dimension_numbers = #tpu.dot_dimension_numbers<[1], [0], [0], [1], [0, 0, 1, 1], [], []>} : vector<8x128xf32>, vector<128x128xf32>, vector<8x128xf32> -> vector<8x128xf32>
    %c0_31 = arith.constant 0 : index
    %c0_32 = arith.constant 0 : index
    %58 = vector.load %arg8[%c0_31, %c0_32] : memref<1x128xf32, #tpu.memory_space<vmem>>, vector<1x128xf32>
    %59 = vector.broadcast %58 : vector<1x128xf32> to vector<8x128xf32>
    %60 = arith.addf %57, %59 : vector<8x128xf32>
    %c0_33 = arith.constant 0 : index
    %c0_34 = arith.constant 0 : index
    %c0_35 = arith.constant 0 : index
    %61 = vector.load %arg11[%c0_33, %c0_34, %c0_35] : memref<1x8x128xf32, #tpu.memory_space<vmem>>, vector<1x8x128xf32>
    %62 = vector.shape_cast %61 : vector<1x8x128xf32> to vector<8x128xf32>
    %63 = vector.shape_cast %60 : vector<8x128xf32> to vector<1x8x128xf32>
    tpu.vector_store %arg11[%c0_33, %c0_34, %c0_35], %63 {strides = array<i32>} : memref<1x8x128xf32, #tpu.memory_space<vmem>>, vector<1x8x128xf32>,
    %64 = tpu.iota {dimensions = array<i32: 1>} : vector<8x128xi32>
    %65 = arith.sitofp %64 : vector<8x128xi32> to vector<8x128xf32>
    %cst_36 = arith.constant dense<0xFF800000> : vector<8xf32>
    %66 = vector.multi_reduction <maximumf>, %60, %cst_36 [1] : vector<8x128xf32> to vector<8xf32>
    %67 = vector.shape_cast %66 : vector<8xf32> to vector<8x1xf32>
    %68 = vector.broadcast %67 : vector<8x1xf32> to vector<8x128xf32>
    %69 = arith.cmpf oeq, %60, %68 : vector<8x128xf32>
    %cst_37 = arith.constant 1.280000e+02 : f32
    %70 = vector.broadcast %cst_37 : f32 to vector<8x128xf32>
    %71 = arith.select %69, %65, %70 : vector<8x128xi1>, vector<8x128xf32>
    %cst_38 = arith.constant dense<0x7F800000> : vector<8xf32>
    %72 = vector.multi_reduction <minimumf>, %71, %cst_38 [1] : vector<8x128xf32> to vector<8xf32>
    %73 = vector.shape_cast %72 : vector<8xf32> to vector<8x1xf32>
    %74 = arith.fptosi %73 : vector<8x1xf32> to vector<8x1xi32>
    %c0_39 = arith.constant 0 : index
    %c0_40 = arith.constant 0 : index
    %75 = vector.load %arg14[%c0_39, %c0_40] : memref<8x1xi32, #tpu.memory_space<vmem>>, vector<8x1xi32>
    tpu.vector_store %arg14[%c0_39, %c0_40], %74 {strides = array<i32>} : memref<8x1xi32, #tpu.memory_space<vmem>>, vector<8x1xi32>,
    return
  }
  func.func @transform_0(%arg0: i32, %arg1: memref<8xi32, #tpu.memory_space<smem>>) -> (i32, i32, i32) {
    %c0_i32 = arith.constant 0 : i32
    %c0_i32_0 = arith.constant 0 : i32
    %c0_i32_1 = arith.constant 0 : i32
    return %arg0, %c0_i32, %c0_i32_0 : i32, i32, i32
  }
  func.func @transform_1(%arg0: i32, %arg1: memref<8xi32, #tpu.memory_space<smem>>) -> (i32, i32) {
    %c0_i32 = arith.constant 0 : i32
    %c0_i32_0 = arith.constant 0 : i32
    %c0_i32_1 = arith.constant 0 : i32
    return %c0_i32, %c0_i32_0 : i32, i32
  }
  func.func @transform_2(%arg0: i32, %arg1: memref<8xi32, #tpu.memory_space<smem>>) -> (i32, i32) {
    %c0_i32 = arith.constant 0 : i32
    %c0_i32_0 = arith.constant 0 : i32
    %c0_i32_1 = arith.constant 0 : i32
    return %c0_i32, %c0_i32_0 : i32, i32
  }
  func.func @transform_3(%arg0: i32, %arg1: memref<8xi32, #tpu.memory_space<smem>>) -> (i32, i32) {
    %c0_i32 = arith.constant 0 : i32
    %c0_i32_0 = arith.constant 0 : i32
    %c0_i32_1 = arith.constant 0 : i32
    return %c0_i32, %c0_i32_0 : i32, i32
  }
  func.func @transform_4(%arg0: i32, %arg1: memref<8xi32, #tpu.memory_space<smem>>) -> (i32, i32) {
    %c0_i32 = arith.constant 0 : i32
    %c0_i32_0 = arith.constant 0 : i32
    %c0_i32_1 = arith.constant 0 : i32
    return %c0_i32, %c0_i32_0 : i32, i32
  }
  func.func @transform_5(%arg0: i32, %arg1: memref<8xi32, #tpu.memory_space<smem>>) -> (i32, i32) {
    %c0_i32 = arith.constant 0 : i32
    %c0_i32_0 = arith.constant 0 : i32
    %c0_i32_1 = arith.constant 0 : i32
    return %c0_i32, %c0_i32_0 : i32, i32
  }
  func.func @transform_6(%arg0: i32, %arg1: memref<8xi32, #tpu.memory_space<smem>>) -> (i32, i32) {
    %c0_i32 = arith.constant 0 : i32
    %c0_i32_0 = arith.constant 0 : i32
    %c0_i32_1 = arith.constant 0 : i32
    return %c0_i32, %c0_i32_0 : i32, i32
  }
  func.func @transform_7(%arg0: i32, %arg1: memref<8xi32, #tpu.memory_space<smem>>) -> (i32, i32) {
    %c0_i32 = arith.constant 0 : i32
    %c0_i32_0 = arith.constant 0 : i32
    %c0_i32_1 = arith.constant 0 : i32
    return %c0_i32, %c0_i32_0 : i32, i32
  }
  func.func @transform_8(%arg0: i32, %arg1: memref<8xi32, #tpu.memory_space<smem>>) -> (i32, i32) {
    %c0_i32 = arith.constant 0 : i32
    %c0_i32_0 = arith.constant 0 : i32
    %c0_i32_1 = arith.constant 0 : i32
    return %c0_i32, %c0_i32_0 : i32, i32
  }
  func.func @transform_9(%arg0: i32, %arg1: memref<8xi32, #tpu.memory_space<smem>>) -> (i32, i32, i32) {
    %c0_i32 = arith.constant 0 : i32
    %c0_i32_0 = arith.constant 0 : i32
    %c0_i32_1 = arith.constant 0 : i32
    return %arg0, %c0_i32, %c0_i32_0 : i32, i32, i32
  }
}

</mosaic_0001>

<llo_original>
// kernel: seq2seq_forward.2
$region0: #{seq2seq_forward.2}
  #allocation0 [shape = 'u32[]', space=smem, size = 0x4, offset = 0x4, fixed_abs, tag = 'smem constant byte address 0x4 - core index']
  #allocation1 [shape = 'u32[144,128]{1,0:T(1,128)}', space=vmem, size = 0x12000, scoped, tag = 'internal scratch']
  #allocation2 [shape = 'f32[8,128]{1,0:T(8,128)}', space=vmem, size = 0x1000, scoped, tag = 'scratch operand']
  #allocation3 [shape = 'f32[8,128]{1,0:T(8,128)}', space=vmem, size = 0x1000, scoped, tag = 'scratch operand']
  %s0 = inlined_call_operand.vmem [shape: f32[8,8,128], index: 0, kind: input, shape index: {}]
  %s1 = inlined_call_operand.vmem [shape: f32[128,512], index: 1, kind: input, shape index: {}]
  %s2 = inlined_call_operand.hbm [shape: f32[128,512], index: 2, kind: input, shape index: {}]
  %s3 = inlined_call_operand.vmem [shape: f32[1,512], index: 3, kind: input, shape index: {}]
  %s4 = inlined_call_operand.vmem [shape: f32[8,128], index: 4, kind: output, shape index: {0}]
  %s5 = inlined_call_operand.vmem [shape: f32[8,128], index: 5, kind: output, shape index: {1}]
  %6 = xla_tuple %s4, %s5
  %s7 = sld [smem:[#allocation0]]
  $region69: #{seq2seq_forward.2} parent=0
    _
  %s9 = ssub.s32 1, %s7
  %s10 = scalar_select 0, %s9, %s7
  $region1: #{seq2seq_forward.2} parent=0
    #allocation4 [shape = 'u8[262144]{0}', space=vmem, size = 0x40000, scoped, tag = 'input window, operand 2, single buffered']
    #allocation5 [shape = 's32[2]{0}', space=sflag, size = 0x8, scoped, tag = 'scoped memory for seq2seq_forward.2']
    %11 = vsyncpa [#allocation5], 0
    loop: start=0, step=1, limit=10
    $region2: #{seq2seq_forward.2} parent=1 // loop_pre_header
      _
    $region3: #{seq2seq_forward.2} parent=1 // loop_header
      %s13 = sphi 0, %s17
      %p14 = scmp.ge.s32.totalorder %s13, 10
      %s23 = sphi 0, %s25
      %s26 = sphi 0, %s23
      %s27 = sphi 0, %s26
      %s43 = sphi 0, %s27
      %s47 = sphi 0, %s47
      %s49 = sphi 0, %s47
      %s50 = sphi 0, %s49
      %s64 = sphi 0, %s50
      %s68 = sphi 0, %s68
      %s70 = sphi 0, %s68
      %s71 = sphi 0, %s70
      %s85 = sphi 0, %s71
      %s89 = sphi 0, %s89
      %s91 = sphi 0, %s89
      %s92 = sphi 0, %s91
      %s106 = sphi 0, %s92
      %s110 = sphi 0, %s110
      %s112 = sphi 0, %s110
      %s113 = sphi 0, %s112
      %s127 = sphi 0, %s113
      %s131 = sphi 0, %s131
      %s133 = sphi 0, %s131
      %s134 = sphi 0, %s133
      %s148 = sphi 0, %s134
    $region4: #{seq2seq_forward.2} parent=1 // loop_header_branch
      %16 = sbr.rel (%p14) target = $region8
    $region5: #{seq2seq_forward.2} parent=1 // loop_body
      %s18 = ssub.s32 %s13, 1
      %s19 = ssub.s32 %s13, 2
      %s20 = sadd.s32 %s13, 1
      %s21 = ssub.s32 %s13, %s20
      %p22 = scmp.eq.s32.totalorder %s21, 0
      %s24 = sadd.s32 %s23, 1
      %s25 = scalar_select %p22, %s23, %s24
      %p28 = pneg %p22
      %p29 = scmp.eq.s32.totalorder %s13, 7
      %p30 = por %p28, %p29
      %p31 = scmp.ne.s32.totalorder %s23, %s26
      %p32 = scmp.eq.s32.totalorder %s13, 0
      %p33 = por %p31, %p32
      %p34 = scmp.ne.s32.totalorder %s23, %s26
      %p35 = scmp.eq.s32.totalorder %s18, 7
      %p36 = por %p34, %p35
      %p37 = scmp.ne.s32.totalorder %s26, %s27
      %p38 = scmp.eq.s32.totalorder %s18, 0
      %p39 = por %p37, %p38
      %p40 = scmp.ne.s32.totalorder %s26, %s27
      %p41 = scmp.eq.s32.totalorder %s19, 7
      %p42 = por %p40, %p41
      %p44 = scmp.ne.s32.totalorder %s27, %s43
      %p45 = scmp.eq.s32.totalorder %s19, 0
      %p46 = por %p44, %p45
      %s48 = sadd.s32 %s47, 1
      %p51 = scmp.eq.s32.totalorder %s13, 7
      %p52 = scmp.ne.s32.totalorder %s47, %s49
      %p53 = scmp.eq.s32.totalorder %s13, 0
      %p54 = por %p52, %p53
      %p55 = scmp.ne.s32.totalorder %s47, %s49
      %p56 = scmp.eq.s32.totalorder %s18, 7
      %p57 = por %p55, %p56
      %p58 = scmp.ne.s32.totalorder %s49, %s50
      %p59 = scmp.eq.s32.totalorder %s18, 0
      %p60 = por %p58, %p59
      %p61 = scmp.ne.s32.totalorder %s49, %s50
      %p62 = scmp.eq.s32.totalorder %s19, 7
      %p63 = por %p61, %p62
      %p65 = scmp.ne.s32.totalorder %s50, %s64
      %p66 = scmp.eq.s32.totalorder %s19, 0
      %p67 = por %p65, %p66
      %s69 = sadd.s32 %s68, 1
      %p72 = scmp.eq.s32.totalorder %s13, 7
      %p73 = scmp.ne.s32.totalorder %s68, %s70
      %p74 = scmp.eq.s32.totalorder %s13, 0
      %p75 = por %p73, %p74
      %p76 = scmp.ne.s32.totalorder %s68, %s70
      %p77 = scmp.eq.s32.totalorder %s18, 7
      %p78 = por %p76, %p77
      %p79 = scmp.ne.s32.totalorder %s70, %s71
      %p80 = scmp.eq.s32.totalorder %s18, 0
      %p81 = por %p79, %p80
      %p82 = scmp.ne.s32.totalorder %s70, %s71
      %p83 = scmp.eq.s32.totalorder %s19, 7
      %p84 = por %p82, %p83
      %p86 = scmp.ne.s32.totalorder %s71, %s85
      %p87 = scmp.eq.s32.totalorder %s19, 0
      %p88 = por %p86, %p87
      %s90 = sadd.s32 %s89, 1
      %p93 = scmp.eq.s32.totalorder %s13, 7
      %p94 = scmp.ne.s32.totalorder %s89, %s91
      %p95 = scmp.eq.s32.totalorder %s13, 0
      %p96 = por %p94, %p95
      %p97 = scmp.ne.s32.totalorder %s89, %s91
      %p98 = scmp.eq.s32.totalorder %s18, 7
      %p99 = por %p97, %p98
      %p100 = scmp.ne.s32.totalorder %s91, %s92
      %p101 = scmp.eq.s32.totalorder %s18, 0
      %p102 = por %p100, %p101
      %p103 = scmp.ne.s32.totalorder %s91, %s92
      %p104 = scmp.eq.s32.totalorder %s19, 7
      %p105 = por %p103, %p104
      %p107 = scmp.ne.s32.totalorder %s92, %s106
      %p108 = scmp.eq.s32.totalorder %s19, 0
      %p109 = por %p107, %p108
      %s111 = sadd.s32 %s110, 1
      %p114 = scmp.eq.s32.totalorder %s13, 7
      %p115 = scmp.ne.s32.totalorder %s110, %s112
      %p116 = scmp.eq.s32.totalorder %s13, 0
      %p117 = por %p115, %p116
      %p118 = scmp.ne.s32.totalorder %s110, %s112
      %p119 = scmp.eq.s32.totalorder %s18, 7
      %p120 = por %p118, %p119
      %p121 = scmp.ne.s32.totalorder %s112, %s113
      %p122 = scmp.eq.s32.totalorder %s18, 0
      %p123 = por %p121, %p122
      %p124 = scmp.ne.s32.totalorder %s112, %s113
      %p125 = scmp.eq.s32.totalorder %s19, 7
      %p126 = por %p124, %p125
      %p128 = scmp.ne.s32.totalorder %s113, %s127
      %p129 = scmp.eq.s32.totalorder %s19, 0
      %p130 = por %p128, %p129
      %s132 = sadd.s32 %s131, 1
      %p135 = scmp.eq.s32.totalorder %s13, 7
      %p136 = scmp.ne.s32.totalorder %s131, %s133
      %p137 = scmp.eq.s32.totalorder %s13, 0
      %p138 = por %p136, %p137
      %p139 = scmp.ne.s32.totalorder %s131, %s133
      %p140 = scmp.eq.s32.totalorder %s18, 7
      %p141 = por %p139, %p140
      %p142 = scmp.ne.s32.totalorder %s133, %s134
      %p143 = scmp.eq.s32.totalorder %s18, 0
      %p144 = por %p142, %p143
      %p145 = scmp.ne.s32.totalorder %s133, %s134
      %p146 = scmp.eq.s32.totalorder %s19, 7
      %p147 = por %p145, %p146
      %p149 = scmp.ne.s32.totalorder %s134, %s148
      %p150 = scmp.eq.s32.totalorder %s19, 0
      %p151 = por %p149, %p150
      %p152 = scmp.le.s32.totalorder 1, %s13
      %p153 = scmp.lt.s32.totalorder %s13, 9
      %p154 = pnand %p152, %p153
      %p155 = pneg %p154
      // Predicated region
      $region9: #{seq2seq_forward.2} parent=5 // pred_check
        _
      $region10: #{seq2seq_forward.2} parent=5 // pred_check_branch
        %157 = sbr.rel (%p154) target = $region12
      $region11: #{seq2seq_forward.2} parent=5 // pred_region
        %s158 = ssub.s32 %s13, 1
        // Predicated region
        $region13: #{seq2seq_forward.2} parent=11 // pred_check
          %p159 = pneg %p60
        $region14: #{seq2seq_forward.2} parent=11 // pred_check_branch
          %161 = sbr.rel (%p159) target = $region16
        $region15: #{seq2seq_forward.2} parent=11 // pred_region
          _
        $region16: #{seq2seq_forward.2} parent=11 // pred_fallthru
          _
        // Predicated region
        $region17: #{seq2seq_forward.2} parent=11 // pred_check
          %p162 = pneg %p81
        $region18: #{seq2seq_forward.2} parent=11 // pred_check_branch
          %164 = sbr.rel (%p162) target = $region20
        $region19: #{seq2seq_forward.2} parent=11 // pred_region
          %s166 = ssub.s32 8192, 8192
          %167 = vsyncadd [#allocation5], %s166
          %s168 = sshll.u32 [#allocation4], 4
          %s169 = int_to_ptr.vmem [resolvable:$true] %s168
          %174 = dma.hbm_to_vmem [thread:$0]  %s2, 8192, %s169, [#allocation5], 512, 512, 32
        $region20: #{seq2seq_forward.2} parent=11 // pred_fallthru
          _
        // Predicated region
        $region21: #{seq2seq_forward.2} parent=11 // pred_check
          %p175 = pneg %p102
        $region22: #{seq2seq_forward.2} parent=11 // pred_check_branch
          %177 = sbr.rel (%p175) target = $region24
        $region23: #{seq2seq_forward.2} parent=11 // pred_region
          _
        $region24: #{seq2seq_forward.2} parent=11 // pred_fallthru
          _
      $region12: #{seq2seq_forward.2} parent=5 // pred_fallthru
        _
      %p178 = scmp.lt.s32.totalorder %s13, 8
      // Predicated region
      $region25: #{seq2seq_forward.2} parent=5 // pred_check
        %p179 = pneg %p178
      $region26: #{seq2seq_forward.2} parent=5 // pred_check_branch
        %181 = sbr.rel (%p179) target = $region28
      $region27: #{seq2seq_forward.2} parent=5 // pred_region
        // Predicated region
        $region29: #{seq2seq_forward.2} parent=27 // pred_check
          %p182 = pneg %p33
        $region30: #{seq2seq_forward.2} parent=27 // pred_check_branch
          %184 = sbr.rel (%p182) target = $region32
        $region31: #{seq2seq_forward.2} parent=27 // pred_region
          %p185 = scmp.lt.s32.totalorder %s13, 7
          %s186 = scalar_select %p185, %s13, 7
          %s187 = smul.addr %s186, 8
          %s188 = scalar_lea.vmem %s0, %s187
        $region32: #{seq2seq_forward.2} parent=27 // pred_fallthru
          _
      $region28: #{seq2seq_forward.2} parent=5 // pred_fallthru
        _
      %p189 = scmp.le.s32.totalorder 1, %s13
      %p190 = scmp.lt.s32.totalorder %s13, 9
      %p191 = pnand %p189, %p190
      %p192 = pneg %p191
      // Predicated region
      $region33: #{seq2seq_forward.2} parent=5 // pred_check
        _
      $region34: #{seq2seq_forward.2} parent=5 // pred_check_branch
        %194 = sbr.rel (%p191) target = $region36
      $region35: #{seq2seq_forward.2} parent=5 // pred_region
        %s195 = ssub.s32 %s13, 1
        // Predicated region
        $region37: #{seq2seq_forward.2} parent=35 // pred_check
          %p196 = pneg %p81
        $region38: #{seq2seq_forward.2} parent=35 // pred_check_branch
          %198 = sbr.rel (%p196) target = $region40
        $region39: #{seq2seq_forward.2} parent=35 // pred_region
          %199 = dma.done [#allocation5], 8192
        $region40: #{seq2seq_forward.2} parent=35 // pred_fallthru
          _
        %p200 = scmp.lt.s32.totalorder %s18, 7
        %s201 = scalar_select %p200, %s18, 7
        %s202 = smul.addr %s201, 8
        %s203 = scalar_lea.vmem %s0, %s202
        %p204 = pneg %p39
        %p205 = pneg %p36
        %p206 = pneg %p60
        %p207 = pneg %p57
        %p208 = pneg %p81
        %p209 = pneg %p78
        %p210 = pneg %p102
        %p211 = pneg %p99
        %p212 = pneg %p123
        %p213 = pneg %p120
        %p214 = pneg %p144
        %p215 = pneg %p141
        %p216 = scmp.lt.s32.totalorder %s18, 7
        %s217 = scalar_select %p216, %s18, 7
        %s218 = smul.addr %s217, 8
        %s219 = scalar_lea.vmem %s0, %s218
        %p220 = scmp.eq.s32.totalorder %s18, 0
        // Predicated region
        $region41: #{seq2seq_forward.2} parent=35 // pred_check
          %p221 = pneg %p220
        $region42: #{seq2seq_forward.2} parent=35 // pred_check_branch
          %223 = sbr.rel (%p221) target = $region44
        $region43: #{seq2seq_forward.2} parent=35 // pred_region
          %224 = vst [vmem:[#allocation2] sm:$0xff] 0.0
          %225 = vst [vmem:[#allocation3] sm:$0xff] 0.0
        $region44: #{seq2seq_forward.2} parent=35 // pred_fallthru
          _
        %v226 = vld [vmem:[%s219] sm:$0xff]
        %v227 = vld [vmem:[#allocation2] sm:$0xff]
        %v228 = vld [vmem:[#allocation3] sm:$0xff]
        %v229 = vld [vmem:[%s1] sm:$0xff]
        %v230 = vld [vmem:[%s1 + $0x8] sm:$0xff]
        %v231 = vld [vmem:[%s1 + $0x10] sm:$0xff]
        %v232 = vld [vmem:[%s1 + $0x18] sm:$0xff]
        %v233 = vld [vmem:[%s1 + $0x20] sm:$0xff]
        %v234 = vld [vmem:[%s1 + $0x28] sm:$0xff]
        %v235 = vld [vmem:[%s1 + $0x30] sm:$0xff]
        %v236 = vld [vmem:[%s1 + $0x38] sm:$0xff]
        %v237 = vld [vmem:[%s1 + $0x40] sm:$0xff]
        %v238 = vld [vmem:[%s1 + $0x48] sm:$0xff]
        %v239 = vld [vmem:[%s1 + $0x50] sm:$0xff]
        %v240 = vld [vmem:[%s1 + $0x58] sm:$0xff]
        %v241 = vld [vmem:[%s1 + $0x60] sm:$0xff]
        %v242 = vld [vmem:[%s1 + $0x68] sm:$0xff]
        %v243 = vld [vmem:[%s1 + $0x70] sm:$0xff]
        %v244 = vld [vmem:[%s1 + $0x78] sm:$0xff]
        %v245 = vld [vmem:[%s1 + $0x80] sm:$0xff]
        %v246 = vld [vmem:[%s1 + $0x88] sm:$0xff]
        %v247 = vld [vmem:[%s1 + $0x90] sm:$0xff]
        %v248 = vld [vmem:[%s1 + $0x98] sm:$0xff]
        %v249 = vld [vmem:[%s1 + $0xa0] sm:$0xff]
        %v250 = vld [vmem:[%s1 + $0xa8] sm:$0xff]
        %v251 = vld [vmem:[%s1 + $0xb0] sm:$0xff]
        %v252 = vld [vmem:[%s1 + $0xb8] sm:$0xff]
        %v253 = vld [vmem:[%s1 + $0xc0] sm:$0xff]
        %v254 = vld [vmem:[%s1 + $0xc8] sm:$0xff]
        %v255 = vld [vmem:[%s1 + $0xd0] sm:$0xff]
        %v256 = vld [vmem:[%s1 + $0xd8] sm:$0xff]
        %v257 = vld [vmem:[%s1 + $0xe0] sm:$0xff]
        %v258 = vld [vmem:[%s1 + $0xe8] sm:$0xff]
        %v259 = vld [vmem:[%s1 + $0xf0] sm:$0xff]
        %v260 = vld [vmem:[%s1 + $0xf8] sm:$0xff]
        %v261 = vld [vmem:[%s1 + $0x100] sm:$0xff]
        %v262 = vld [vmem:[%s1 + $0x108] sm:$0xff]
        %v263 = vld [vmem:[%s1 + $0x110] sm:$0xff]
        %v264 = vld [vmem:[%s1 + $0x118] sm:$0xff]
        %v265 = vld [vmem:[%s1 + $0x120] sm:$0xff]
        %v266 = vld [vmem:[%s1 + $0x128] sm:$0xff]
        %v267 = vld [vmem:[%s1 + $0x130] sm:$0xff]
        %v268 = vld [vmem:[%s1 + $0x138] sm:$0xff]
        %v269 = vld [vmem:[%s1 + $0x140] sm:$0xff]
        %v270 = vld [vmem:[%s1 + $0x148] sm:$0xff]
        %v271 = vld [vmem:[%s1 + $0x150] sm:$0xff]
        %v272 = vld [vmem:[%s1 + $0x158] sm:$0xff]
        %v273 = vld [vmem:[%s1 + $0x160] sm:$0xff]
        %v274 = vld [vmem:[%s1 + $0x168] sm:$0xff]
        %v275 = vld [vmem:[%s1 + $0x170] sm:$0xff]
        %v276 = vld [vmem:[%s1 + $0x178] sm:$0xff]
        %v277 = vld [vmem:[%s1 + $0x180] sm:$0xff]
        %v278 = vld [vmem:[%s1 + $0x188] sm:$0xff]
        %v279 = vld [vmem:[%s1 + $0x190] sm:$0xff]
        %v280 = vld [vmem:[%s1 + $0x198] sm:$0xff]
        %v281 = vld [vmem:[%s1 + $0x1a0] sm:$0xff]
        %v282 = vld [vmem:[%s1 + $0x1a8] sm:$0xff]
        %v283 = vld [vmem:[%s1 + $0x1b0] sm:$0xff]
        %v284 = vld [vmem:[%s1 + $0x1b8] sm:$0xff]
        %v285 = vld [vmem:[%s1 + $0x1c0] sm:$0xff]
        %v286 = vld [vmem:[%s1 + $0x1c8] sm:$0xff]
        %v287 = vld [vmem:[%s1 + $0x1d0] sm:$0xff]
        %v288 = vld [vmem:[%s1 + $0x1d8] sm:$0xff]
        %v289 = vld [vmem:[%s1 + $0x1e0] sm:$0xff]
        %v290 = vld [vmem:[%s1 + $0x1e8] sm:$0xff]
        %v291 = vld [vmem:[%s1 + $0x1f0] sm:$0xff]
        %v292 = vld [vmem:[%s1 + $0x1f8] sm:$0xff]
        %v293 = vld [vmem:[#allocation4] sm:$0xff]
        %v294 = vld [vmem:[#allocation4 + $0x8] sm:$0xff]
        %v295 = vld [vmem:[#allocation4 + $0x10] sm:$0xff]
        %v296 = vld [vmem:[#allocation4 + $0x18] sm:$0xff]
        %v297 = vld [vmem:[#allocation4 + $0x20] sm:$0xff]
        %v298 = vld [vmem:[#allocation4 + $0x28] sm:$0xff]
        %v299 = vld [vmem:[#allocation4 + $0x30] sm:$0xff]
        %v300 = vld [vmem:[#allocation4 + $0x38] sm:$0xff]
        %v301 = vld [vmem:[#allocation4 + $0x40] sm:$0xff]
        %v302 = vld [vmem:[#allocation4 + $0x48] sm:$0xff]
        %v303 = vld [vmem:[#allocation4 + $0x50] sm:$0xff]
        %v304 = vld [vmem:[#allocation4 + $0x58] sm:$0xff]
        %v305 = vld [vmem:[#allocation4 + $0x60] sm:$0xff]
        %v306 = vld [vmem:[#allocation4 + $0x68] sm:$0xff]
        %v307 = vld [vmem:[#allocation4 + $0x70] sm:$0xff]
        %v308 = vld [vmem:[#allocation4 + $0x78] sm:$0xff]
        %v309 = vld [vmem:[#allocation4 + $0x80] sm:$0xff]
        %v310 = vld [vmem:[#allocation4 + $0x88] sm:$0xff]
        %v311 = vld [vmem:[#allocation4 + $0x90] sm:$0xff]
        %v312 = vld [vmem:[#allocation4 + $0x98] sm:$0xff]
        %v313 = vld [vmem:[#allocation4 + $0xa0] sm:$0xff]
        %v314 = vld [vmem:[#allocation4 + $0xa8] sm:$0xff]
        %v315 = vld [vmem:[#allocation4 + $0xb0] sm:$0xff]
        %v316 = vld [vmem:[#allocation4 + $0xb8] sm:$0xff]
        %v317 = vld [vmem:[#allocation4 + $0xc0] sm:$0xff]
        %v318 = vld [vmem:[#allocation4 + $0xc8] sm:$0xff]
        %v319 = vld [vmem:[#allocation4 + $0xd0] sm:$0xff]
        %v320 = vld [vmem:[#allocation4 + $0xd8] sm:$0xff]
        %v321 = vld [vmem:[#allocation4 + $0xe0] sm:$0xff]
        %v322 = vld [vmem:[#allocation4 + $0xe8] sm:$0xff]
        %v323 = vld [vmem:[#allocation4 + $0xf0] sm:$0xff]
        %v324 = vld [vmem:[#allocation4 + $0xf8] sm:$0xff]
        %v325 = vld [vmem:[#allocation4 + $0x100] sm:$0xff]
        %v326 = vld [vmem:[#allocation4 + $0x108] sm:$0xff]
        %v327 = vld [vmem:[#allocation4 + $0x110] sm:$0xff]
        %v328 = vld [vmem:[#allocation4 + $0x118] sm:$0xff]
        %v329 = vld [vmem:[#allocation4 + $0x120] sm:$0xff]
        %v330 = vld [vmem:[#allocation4 + $0x128] sm:$0xff]
        %v331 = vld [vmem:[#allocation4 + $0x130] sm:$0xff]
        %v332 = vld [vmem:[#allocation4 + $0x138] sm:$0xff]
        %v333 = vld [vmem:[#allocation4 + $0x140] sm:$0xff]
        %v334 = vld [vmem:[#allocation4 + $0x148] sm:$0xff]
        %v335 = vld [vmem:[#allocation4 + $0x150] sm:$0xff]
        %v336 = vld [vmem:[#allocation4 + $0x158] sm:$0xff]
        %v337 = vld [vmem:[#allocation4 + $0x160] sm:$0xff]
        %v338 = vld [vmem:[#allocation4 + $0x168] sm:$0xff]
        %v339 = vld [vmem:[#allocation4 + $0x170] sm:$0xff]
        %v340 = vld [vmem:[#allocation4 + $0x178] sm:$0xff]
        %v341 = vld [vmem:[#allocation4 + $0x180] sm:$0xff]
        %v342 = vld [vmem:[#allocation4 + $0x188] sm:$0xff]
        %v343 = vld [vmem:[#allocation4 + $0x190] sm:$0xff]
        %v344 = vld [vmem:[#allocation4 + $0x198] sm:$0xff]
        %v345 = vld [vmem:[#allocation4 + $0x1a0] sm:$0xff]
        %v346 = vld [vmem:[#allocation4 + $0x1a8] sm:$0xff]
        %v347 = vld [vmem:[#allocation4 + $0x1b0] sm:$0xff]
        %v348 = vld [vmem:[#allocation4 + $0x1b8] sm:$0xff]
        %v349 = vld [vmem:[#allocation4 + $0x1c0] sm:$0xff]
        %v350 = vld [vmem:[#allocation4 + $0x1c8] sm:$0xff]
        %v351 = vld [vmem:[#allocation4 + $0x1d0] sm:$0xff]
        %v352 = vld [vmem:[#allocation4 + $0x1d8] sm:$0xff]
        %v353 = vld [vmem:[#allocation4 + $0x1e0] sm:$0xff]
        %v354 = vld [vmem:[#allocation4 + $0x1e8] sm:$0xff]
        %v355 = vld [vmem:[#allocation4 + $0x1f0] sm:$0xff]
        %v356 = vld [vmem:[#allocation4 + $0x1f8] sm:$0xff]
        %357 = vmatprep.subr.mxu0 %v294
        %358 = vmatpush1.msra.mxu0 %v293
        %359 = vmatprep.subr.mxu0 %v298
        %360 = vmatpush1.msra.mxu0 %v297
        %361 = vmatprep.subr.mxu0 %v302
        %362 = vmatpush1.msra.mxu0 %v301
        %363 = vmatprep.subr.mxu0 %v306
        %364 = vmatpush1.msra.mxu0 %v305
        %365 = vmatprep.subr.mxu0 %v310
        %366 = vmatpush1.msra.mxu0 %v309
        %367 = vmatprep.subr.mxu0 %v314
        %368 = vmatpush1.msra.mxu0 %v313
        %369 = vmatprep.subr.mxu0 %v318
        %370 = vmatpush1.msra.mxu0 %v317
        %371 = vmatprep.subr.mxu0 %v322
        %372 = vmatpush1.msra.mxu0 %v321
        %373 = vmatprep.subr.mxu0 %v326
        %374 = vmatpush1.msra.mxu0 %v325
        %375 = vmatprep.subr.mxu0 %v330
        %376 = vmatpush1.msra.mxu0 %v329
        %377 = vmatprep.subr.mxu0 %v334
        %378 = vmatpush1.msra.mxu0 %v333
        %379 = vmatprep.subr.mxu0 %v338
        %380 = vmatpush1.msra.mxu0 %v337
        %381 = vmatprep.subr.mxu0 %v342
        %382 = vmatpush1.msra.mxu0 %v341
        %383 = vmatprep.subr.mxu0 %v346
        %384 = vmatpush1.msra.mxu0 %v345
        %385 = vmatprep.subr.mxu0 %v350
        %386 = vmatpush1.msra.mxu0 %v349
        %387 = vmatprep.subr.mxu0 %v354
        %388 = vmatpush1.msra.mxu0 %v353
        %389 = vmatprep.subr.mxu0 0.0
        %390 = vmatpush1.msra.mxu0 0.0
        %391 = vmatprep.subr.mxu0 0.0
        %392 = vmatpush1.msra.mxu0 0.0
        %393 = vmatprep.subr.mxu0 0.0
        %394 = vmatpush1.msra.mxu0 0.0
        %395 = vmatprep.subr.mxu0 0.0
        %396 = vmatpush1.msra.mxu0 0.0
        %397 = vmatprep.subr.mxu0 0.0
        %398 = vmatpush1.msra.mxu0 0.0
        %399 = vmatprep.subr.mxu0 0.0
        %400 = vmatpush1.msra.mxu0 0.0
        %401 = vmatprep.subr.mxu0 0.0
        %402 = vmatpush1.msra.mxu0 0.0
        %403 = vmatprep.subr.mxu0 0.0
        %404 = vmatpush1.msra.mxu0 0.0
        %405 = vmatprep.subr.mxu0 0.0
        %406 = vmatpush1.msra.mxu0 0.0
        %407 = vmatprep.subr.mxu0 0.0
        %408 = vmatpush1.msra.mxu0 0.0
        %409 = vmatprep.subr.mxu0 0.0
        %410 = vmatpush1.msra.mxu0 0.0
        %411 = vmatprep.subr.mxu0 0.0
        %412 = vmatpush1.msra.mxu0 0.0
        %413 = vmatprep.subr.mxu0 0.0
        %414 = vmatpush1.msra.mxu0 0.0
        %415 = vmatprep.subr.mxu0 0.0
        %416 = vmatpush1.msra.mxu0 0.0
        %417 = vmatprep.subr.mxu0 0.0
        %418 = vmatpush1.msra.mxu0 0.0
        %419 = vmatprep.subr.mxu0 0.0
        %420 = vmatpush1.msra.mxu0 0.0
        %421 = vmatprep.mubr.f32.mxu0 0.0
        %422 = vmatmul.mubr.f32.gmra.mrb[0].mxu0 %v227
        %v423 = vpop.f32.mrb[0].mxu0
        %v424 = vadd.f32 0.0, %v423
        %v425 = vpop.f32.mrb[0].mxu0
        %v426 = vadd.f32 0.0, %v425
        %427 = vdwg.mxu0
        %428 = vmatprep.subr.mxu0 %v296
        %429 = vmatpush1.msra.mxu0 %v295
        %430 = vmatprep.subr.mxu0 %v300
        %431 = vmatpush1.msra.mxu0 %v299
        %432 = vmatprep.subr.mxu0 %v304
        %433 = vmatpush1.msra.mxu0 %v303
        %434 = vmatprep.subr.mxu0 %v308
        %435 = vmatpush1.msra.mxu0 %v307
        %436 = vmatprep.subr.mxu0 %v312
        %437 = vmatpush1.msra.mxu0 %v311
        %438 = vmatprep.subr.mxu0 %v316
        %439 = vmatpush1.msra.mxu0 %v315
        %440 = vmatprep.subr.mxu0 %v320
        %441 = vmatpush1.msra.mxu0 %v319
        %442 = vmatprep.subr.mxu0 %v324
        %443 = vmatpush1.msra.mxu0 %v323
        %444 = vmatprep.subr.mxu0 %v328
        %445 = vmatpush1.msra.mxu0 %v327
        %446 = vmatprep.subr.mxu0 %v332
        %447 = vmatpush1.msra.mxu0 %v331
        %448 = vmatprep.subr.mxu0 %v336
        %449 = vmatpush1.msra.mxu0 %v335
        %450 = vmatprep.subr.mxu0 %v340
        %451 = vmatpush1.msra.mxu0 %v339
        %452 = vmatprep.subr.mxu0 %v344
        %453 = vmatpush1.msra.mxu0 %v343
        %454 = vmatprep.subr.mxu0 %v348
        %455 = vmatpush1.msra.mxu0 %v347
        %456 = vmatprep.subr.mxu0 %v352
        %457 = vmatpush1.msra.mxu0 %v351
        %458 = vmatprep.subr.mxu0 %v356
        %459 = vmatpush1.msra.mxu0 %v355
        %460 = vmatprep.subr.mxu0 0.0
        %461 = vmatpush1.msra.mxu0 0.0
        %462 = vmatprep.subr.mxu0 0.0
        %463 = vmatpush1.msra.mxu0 0.0
        %464 = vmatprep.subr.mxu0 0.0
        %465 = vmatpush1.msra.mxu0 0.0
        %466 = vmatprep.subr.mxu0 0.0
        %467 = vmatpush1.msra.mxu0 0.0
        %468 = vmatprep.subr.mxu0 0.0
        %469 = vmatpush1.msra.mxu0 0.0
        %470 = vmatprep.subr.mxu0 0.0
        %471 = vmatpush1.msra.mxu0 0.0
        %472 = vmatprep.subr.mxu0 0.0
        %473 = vmatpush1.msra.mxu0 0.0
        %474 = vmatprep.subr.mxu0 0.0
        %475 = vmatpush1.msra.mxu0 0.0
        %476 = vmatprep.subr.mxu0 0.0
        %477 = vmatpush1.msra.mxu0 0.0
        %478 = vmatprep.subr.mxu0 0.0
        %479 = vmatpush1.msra.mxu0 0.0
        %480 = vmatprep.subr.mxu0 0.0
        %481 = vmatpush1.msra.mxu0 0.0
        %482 = vmatprep.subr.mxu0 0.0
        %483 = vmatpush1.msra.mxu0 0.0
        %484 = vmatprep.subr.mxu0 0.0
        %485 = vmatpush1.msra.mxu0 0.0
        %486 = vmatprep.subr.mxu0 0.0
        %487 = vmatpush1.msra.mxu0 0.0
        %488 = vmatprep.subr.mxu0 0.0
        %489 = vmatpush1.msra.mxu0 0.0
        %490 = vmatprep.subr.mxu0 0.0
        %491 = vmatpush1.msra.mxu0 0.0
        %492 = vmatprep.mubr.f32.mxu0 0.0
        %493 = vmatmul.mubr.f32.gmra.mrb[0].mxu0 %v227
        %v494 = vpop.f32.mrb[0].mxu0
        %v495 = vadd.f32 0.0, %v494
        %v496 = vpop.f32.mrb[0].mxu0
        %v497 = vadd.f32 0.0, %v496
        %498 = vdwg.mxu0
        %499 = vmatprep.subr.mxu0 %v230
        %500 = vmatpush1.msra.mxu0 %v229
        %501 = vmatprep.subr.mxu0 %v234
        %502 = vmatpush1.msra.mxu0 %v233
        %503 = vmatprep.subr.mxu0 %v238
        %504 = vmatpush1.msra.mxu0 %v237
        %505 = vmatprep.subr.mxu0 %v242
        %506 = vmatpush1.msra.mxu0 %v241
        %507 = vmatprep.subr.mxu0 %v246
        %508 = vmatpush1.msra.mxu0 %v245
        %509 = vmatprep.subr.mxu0 %v250
        %510 = vmatpush1.msra.mxu0 %v249
        %511 = vmatprep.subr.mxu0 %v254
        %512 = vmatpush1.msra.mxu0 %v253
        %513 = vmatprep.subr.mxu0 %v258
        %514 = vmatpush1.msra.mxu0 %v257
        %515 = vmatprep.subr.mxu0 %v262
        %516 = vmatpush1.msra.mxu0 %v261
        %517 = vmatprep.subr.mxu0 %v266
        %518 = vmatpush1.msra.mxu0 %v265
        %519 = vmatprep.subr.mxu0 %v270
        %520 = vmatpush1.msra.mxu0 %v269
        %521 = vmatprep.subr.mxu0 %v274
        %522 = vmatpush1.msra.mxu0 %v273
        %523 = vmatprep.subr.mxu0 %v278
        %524 = vmatpush1.msra.mxu0 %v277
        %525 = vmatprep.subr.mxu0 %v282
        %526 = vmatpush1.msra.mxu0 %v281
        %527 = vmatprep.subr.mxu0 %v286
        %528 = vmatpush1.msra.mxu0 %v285
        %529 = vmatprep.subr.mxu0 %v290
        %530 = vmatpush1.msra.mxu0 %v289
        %531 = vmatprep.subr.mxu0 0.0
        %532 = vmatpush1.msra.mxu0 0.0
        %533 = vmatprep.subr.mxu0 0.0
        %534 = vmatpush1.msra.mxu0 0.0
        %535 = vmatprep.subr.mxu0 0.0
        %536 = vmatpush1.msra.mxu0 0.0
        %537 = vmatprep.subr.mxu0 0.0
        %538 = vmatpush1.msra.mxu0 0.0
        %539 = vmatprep.subr.mxu0 0.0
        %540 = vmatpush1.msra.mxu0 0.0
        %541 = vmatprep.subr.mxu0 0.0
        %542 = vmatpush1.msra.mxu0 0.0
        %543 = vmatprep.subr.mxu0 0.0
        %544 = vmatpush1.msra.mxu0 0.0
        %545 = vmatprep.subr.mxu0 0.0
        %546 = vmatpush1.msra.mxu0 0.0
        %547 = vmatprep.subr.mxu0 0.0
        %548 = vmatpush1.msra.mxu0 0.0
        %549 = vmatprep.subr.mxu0 0.0
        %550 = vmatpush1.msra.mxu0 0.0
        %551 = vmatprep.subr.mxu0 0.0
        %552 = vmatpush1.msra.mxu0 0.0
        %553 = vmatprep.subr.mxu0 0.0
        %554 = vmatpush1.msra.mxu0 0.0
        %555 = vmatprep.subr.mxu0 0.0
        %556 = vmatpush1.msra.mxu0 0.0
        %557 = vmatprep.subr.mxu0 0.0
        %558 = vmatpush1.msra.mxu0 0.0
        %559 = vmatprep.subr.mxu0 0.0
        %560 = vmatpush1.msra.mxu0 0.0
        %561 = vmatprep.subr.mxu0 0.0
        %562 = vmatpush1.msra.mxu0 0.0
        %563 = vmatprep.mubr.f32.mxu0 0.0
        %564 = vmatmul.mubr.f32.gmra.mrb[0].mxu0 %v226
        %v565 = vpop.f32.mrb[0].mxu0
        %v566 = vadd.f32 %v424, %v565
        %v567 = vpop.f32.mrb[0].mxu0
        %v568 = vadd.f32 %v426, %v567
        %569 = vdwg.mxu0
        %570 = vmatprep.subr.mxu0 %v232
        %571 = vmatpush1.msra.mxu0 %v231
        %572 = vmatprep.subr.mxu0 %v236
        %573 = vmatpush1.msra.mxu0 %v235
        %574 = vmatprep.subr.mxu0 %v240
        %575 = vmatpush1.msra.mxu0 %v239
        %576 = vmatprep.subr.mxu0 %v244
        %577 = vmatpush1.msra.mxu0 %v243
        %578 = vmatprep.subr.mxu0 %v248
        %579 = vmatpush1.msra.mxu0 %v247
        %580 = vmatprep.subr.mxu0 %v252
        %581 = vmatpush1.msra.mxu0 %v251
        %582 = vmatprep.subr.mxu0 %v256
        %583 = vmatpush1.msra.mxu0 %v255
        %584 = vmatprep.subr.mxu0 %v260
        %585 = vmatpush1.msra.mxu0 %v259
        %586 = vmatprep.subr.mxu0 %v264
        %587 = vmatpush1.msra.mxu0 %v263
        %588 = vmatprep.subr.mxu0 %v268
        %589 = vmatpush1.msra.mxu0 %v267
        %590 = vmatprep.subr.mxu0 %v272
        %591 = vmatpush1.msra.mxu0 %v271
        %592 = vmatprep.subr.mxu0 %v276
        %593 = vmatpush1.msra.mxu0 %v275
        %594 = vmatprep.subr.mxu0 %v280
        %595 = vmatpush1.msra.mxu0 %v279
        %596 = vmatprep.subr.mxu0 %v284
        %597 = vmatpush1.msra.mxu0 %v283
        %598 = vmatprep.subr.mxu0 %v288
        %599 = vmatpush1.msra.mxu0 %v287
        %600 = vmatprep.subr.mxu0 %v292
        %601 = vmatpush1.msra.mxu0 %v291
        %602 = vmatprep.subr.mxu0 0.0
        %603 = vmatpush1.msra.mxu0 0.0
        %604 = vmatprep.subr.mxu0 0.0
        %605 = vmatpush1.msra.mxu0 0.0
        %606 = vmatprep.subr.mxu0 0.0
        %607 = vmatpush1.msra.mxu0 0.0
        %608 = vmatprep.subr.mxu0 0.0
        %609 = vmatpush1.msra.mxu0 0.0
        %610 = vmatprep.subr.mxu0 0.0
        %611 = vmatpush1.msra.mxu0 0.0
        %612 = vmatprep.subr.mxu0 0.0
        %613 = vmatpush1.msra.mxu0 0.0
        %614 = vmatprep.subr.mxu0 0.0
        %615 = vmatpush1.msra.mxu0 0.0
        %616 = vmatprep.subr.mxu0 0.0
        %617 = vmatpush1.msra.mxu0 0.0
        %618 = vmatprep.subr.mxu0 0.0
        %619 = vmatpush1.msra.mxu0 0.0
        %620 = vmatprep.subr.mxu0 0.0
        %621 = vmatpush1.msra.mxu0 0.0
        %622 = vmatprep.subr.mxu0 0.0
        %623 = vmatpush1.msra.mxu0 0.0
        %624 = vmatprep.subr.mxu0 0.0
        %625 = vmatpush1.msra.mxu0 0.0
        %626 = vmatprep.subr.mxu0 0.0
        %627 = vmatpush1.msra.mxu0 0.0
        %628 = vmatprep.subr.mxu0 0.0
        %629 = vmatpush1.msra.mxu0 0.0
        %630 = vmatprep.subr.mxu0 0.0
        %631 = vmatpush1.msra.mxu0 0.0
        %632 = vmatprep.subr.mxu0 0.0
        %633 = vmatpush1.msra.mxu0 0.0
        %634 = vmatprep.mubr.f32.mxu0 0.0
        %635 = vmatmul.mubr.f32.gmra.mrb[0].mxu0 %v226
        %v636 = vpop.f32.mrb[0].mxu0
        %v637 = vadd.f32 %v495, %v636
        %v638 = vpop.f32.mrb[0].mxu0
        %v639 = vadd.f32 %v497, %v638
        %640 = vdwg.mxu0
        %v641 = vld [vmem:[%s3] sm:$0xf]
        %v643 = vlaneseq
        %v644 = vshrl.u32 %v643, 7
        %v645 = vsub.s32 0, %v644
        %v646 = vrot.slane %v641, %v645
        %v647 = vlaneseq
        %v648 = vshrl.u32 %v647, 7
        %v649 = vsub.s32 1, %v648
        %v650 = vrot.slane %v641, %v649
        %v651 = vlaneseq
        %v652 = vshrl.u32 %v651, 7
        %v653 = vsub.s32 2, %v652
        %v654 = vrot.slane %v641, %v653
        %v655 = vlaneseq
        %v656 = vshrl.u32 %v655, 7
        %v657 = vsub.s32 3, %v656
        %v658 = vrot.slane %v641, %v657
        %v663 = vadd.f32 %v566, %v646
        %v664 = vadd.f32 %v568, %v650
        %v665 = vadd.f32 %v637, %v654
        %v666 = vadd.f32 %v639, %v658
        %v667 = vxor.u32 %v663, 2147483648
        %v668 = vmul.f32 %v667, 1.442695
        %v669 = vpow.pop %v668
        %v670 = vadd.f32 %v669, 1.0
        %v671 = vrcp.pop %v670
        %v672 = vmul.f32 1.0, %v671
        %v673 = vxor.u32 %v664, 2147483648
        %v674 = vmul.f32 %v673, 1.442695
        %v675 = vpow.pop %v674
        %v676 = vadd.f32 %v675, 1.0
        %v677 = vrcp.pop %v676
        %v678 = vmul.f32 1.0, %v677
        %v679 = vtanh.pop %v665
        %v680 = vxor.u32 %v666, 2147483648
        %v681 = vmul.f32 %v680, 1.442695
        %v682 = vpow.pop %v681
        %v683 = vadd.f32 %v682, 1.0
        %v684 = vrcp.pop %v683
        %v685 = vmul.f32 1.0, %v684
        %v686 = vmul.f32 %v678, %v228
        %v687 = vmul.f32 %v672, %v679
        %v688 = vadd.f32 %v686, %v687
        %v689 = vtanh.pop %v688
        %v690 = vmul.f32 %v685, %v689
        %691 = vst [vmem:[#allocation2] sm:$0xff] %v690
        %692 = vst [vmem:[#allocation3] sm:$0xff] %v688
        %p693 = scmp.eq.s32.totalorder %s18, 7
        // Predicated region
        $region45: #{seq2seq_forward.2} parent=35 // pred_check
          %p694 = pneg %p693
        $region46: #{seq2seq_forward.2} parent=35 // pred_check_branch
          %696 = sbr.rel (%p694) target = $region48
        $region47: #{seq2seq_forward.2} parent=35 // pred_region
          %697 = vst [vmem:[%s4] sm:$0xff] %v690
          %698 = vst [vmem:[%s5] sm:$0xff] %v688
        $region48: #{seq2seq_forward.2} parent=35 // pred_fallthru
          _
        // Predicated region
        $region49: #{seq2seq_forward.2} parent=35 // pred_check
          %p699 = pneg %p120
        $region50: #{seq2seq_forward.2} parent=35 // pred_check_branch
          %701 = sbr.rel (%p699) target = $region52
        $region51: #{seq2seq_forward.2} parent=35 // pred_region
          _
        $region52: #{seq2seq_forward.2} parent=35 // pred_fallthru
          _
        // Predicated region
        $region53: #{seq2seq_forward.2} parent=35 // pred_check
          %p702 = pneg %p141
        $region54: #{seq2seq_forward.2} parent=35 // pred_check_branch
          %704 = sbr.rel (%p702) target = $region56
        $region55: #{seq2seq_forward.2} parent=35 // pred_region
          _
        $region56: #{seq2seq_forward.2} parent=35 // pred_fallthru
          _
        // Predicated region
        $region57: #{seq2seq_forward.2} parent=35 // pred_check
          %p705 = pneg %p120
        $region58: #{seq2seq_forward.2} parent=35 // pred_check_branch
          %707 = sbr.rel (%p705) target = $region60
        $region59: #{seq2seq_forward.2} parent=35 // pred_region
          _
        $region60: #{seq2seq_forward.2} parent=35 // pred_fallthru
          _
        // Predicated region
        $region61: #{seq2seq_forward.2} parent=35 // pred_check
          %p708 = pneg %p141
        $region62: #{seq2seq_forward.2} parent=35 // pred_check_branch
          %710 = sbr.rel (%p708) target = $region64
        $region63: #{seq2seq_forward.2} parent=35 // pred_region
          _
        $region64: #{seq2seq_forward.2} parent=35 // pred_fallthru
          _
      $region36: #{seq2seq_forward.2} parent=5 // pred_fallthru
        _
      %p711 = scmp.le.s32.totalorder 2, %s13
      // Predicated region
      $region65: #{seq2seq_forward.2} parent=5 // pred_check
        %p712 = pneg %p711
      $region66: #{seq2seq_forward.2} parent=5 // pred_check_branch
        %714 = sbr.rel (%p712) target = $region68
      $region67: #{seq2seq_forward.2} parent=5 // pred_region
        %s715 = ssub.s32 %s13, 2
      $region68: #{seq2seq_forward.2} parent=5 // pred_fallthru
        _
    $region6: #{seq2seq_forward.2} parent=1 // loop_footer
      %s17 = sadd.s32 1, %s13
    $region7: #{seq2seq_forward.2} parent=1 // loop_footer_branch
      %12 = sbr.rel target = $region3
    $region8: #{seq2seq_forward.2} parent=1 // loop_exit
      _
    %716 = vsyncpa [#allocation5], 1
    %s717 = scalar_lea.sflag [#allocation5], 1
    %718 = vsyncpa %s717, 1

// kernel: seq2seq_forward.3
$region0: #{seq2seq_forward.3}
  #allocation0 [shape = 'u32[]', space=smem, size = 0x4, offset = 0x4, fixed_abs, tag = 'smem constant byte address 0x4 - core index']
  #allocation1 [shape = 'u32[144,128]{1,0:T(1,128)}', space=vmem, size = 0x12000, scoped, tag = 'internal scratch']
  #allocation2 [shape = 'f32[8,128]{1,0:T(8,128)}', space=vmem, size = 0x1000, scoped, tag = 'scratch operand']
  #allocation3 [shape = 'f32[8,128]{1,0:T(8,128)}', space=vmem, size = 0x1000, scoped, tag = 'scratch operand']
  #allocation4 [shape = 's32[8,1]{1,0:T(8,128)}', space=vmem, size = 0x1000, scoped, tag = 'scratch operand']
  #allocation5 [shape = 's32[1]{0}', space=sflag, size = 0x4, scoped, tag = 'scoped memory for seq2seq_forward.3']
  #allocation6 [shape = 'u8[512]{0}', space=smem, size = 0x200, scoped, tag = 'prefetched SMEM operand 0']
  %s0 = inlined_call_operand.vmem [shape: s32[8], index: 0, kind: input, shape index: {}]
  %s1 = inlined_call_operand.vmem [shape: s32[8,8,1], index: 1, kind: input, shape index: {}]
  %s2 = inlined_call_operand.vmem [shape: f32[16,128], index: 2, kind: input, shape index: {}]
  %s3 = inlined_call_operand.vmem [shape: f32[128,512], index: 3, kind: input, shape index: {}]
  %s4 = inlined_call_operand.vmem [shape: f32[128,512], index: 4, kind: input, shape index: {}]
  %s5 = inlined_call_operand.vmem [shape: f32[1,512], index: 5, kind: input, shape index: {}]
  %s6 = inlined_call_operand.vmem [shape: f32[128,128], index: 6, kind: input, shape index: {}]
  %s7 = inlined_call_operand.vmem [shape: f32[1,128], index: 7, kind: input, shape index: {}]
  %s8 = inlined_call_operand.vmem [shape: f32[8,128], index: 8, kind: input, shape index: {}]
  %s9 = inlined_call_operand.vmem [shape: f32[8,128], index: 9, kind: input, shape index: {}]
  %s10 = inlined_call_operand.vmem [shape: f32[7,8,128], index: 10, kind: output, shape index: {}]
  %s11 = sld [smem:[#allocation0]]
  $region73: #{seq2seq_forward.3} parent=0
    _
  %s13 = ssub.s32 1, %s11
  %s14 = scalar_select 0, %s13, %s11
  %s15 = sshll.u32 %s0, 4
  %s16 = int_to_ptr.vmem [resolvable:$true] %s15
  %18 = dma.vmem_to_smem %s16, 16, [#allocation6], [#allocation5]
  %19 = dma.done [#allocation5], 16
  %20 = sfence
  loop: start=0, step=1, limit=9
  $region2: #{seq2seq_forward.3} parent=0 // loop_pre_header
    _
  $region3: #{seq2seq_forward.3} parent=0 // loop_header
    %s22 = sphi 0, %s26
    %p23 = scmp.ge.s32.totalorder %s22, 9
    %s32 = sphi 0, %s34
    %s35 = sphi 0, %s32
    %s36 = sphi 0, %s35
    %s52 = sphi 0, %s36
    %s56 = sphi 0, %s56
    %s58 = sphi 0, %s56
    %s59 = sphi 0, %s58
    %s73 = sphi 0, %s59
    %s77 = sphi 0, %s77
    %s79 = sphi 0, %s77
    %s80 = sphi 0, %s79
    %s94 = sphi 0, %s80
    %s98 = sphi 0, %s98
    %s100 = sphi 0, %s98
    %s101 = sphi 0, %s100
    %s115 = sphi 0, %s101
    %s119 = sphi 0, %s119
    %s121 = sphi 0, %s119
    %s122 = sphi 0, %s121
    %s136 = sphi 0, %s122
    %s140 = sphi 0, %s140
    %s142 = sphi 0, %s140
    %s143 = sphi 0, %s142
    %s157 = sphi 0, %s143
    %s161 = sphi 0, %s161
    %s163 = sphi 0, %s161
    %s164 = sphi 0, %s163
    %s178 = sphi 0, %s164
    %s182 = sphi 0, %s182
    %s184 = sphi 0, %s182
    %s185 = sphi 0, %s184
    %s199 = sphi 0, %s185
    %s203 = sphi 0, %s203
    %s205 = sphi 0, %s203
    %s206 = sphi 0, %s205
    %s220 = sphi 0, %s206
    %s226 = sphi 0, %s228
    %s229 = sphi 0, %s226
    %s230 = sphi 0, %s229
    %s246 = sphi 0, %s230
  $region4: #{seq2seq_forward.3} parent=0 // loop_header_branch
    %25 = sbr.rel (%p23) target = $region8
  $region5: #{seq2seq_forward.3} parent=0 // loop_body
    %s27 = ssub.s32 %s22, 1
    %s28 = ssub.s32 %s22, 2
    %s29 = sadd.s32 %s22, 1
    %s30 = ssub.s32 %s22, %s29
    %p31 = scmp.eq.s32.totalorder %s30, 0
    %s33 = sadd.s32 %s32, 1
    %s34 = scalar_select %p31, %s32, %s33
    %p37 = pneg %p31
    %p38 = scmp.eq.s32.totalorder %s22, 6
    %p39 = por %p37, %p38
    %p40 = scmp.ne.s32.totalorder %s32, %s35
    %p41 = scmp.eq.s32.totalorder %s22, 0
    %p42 = por %p40, %p41
    %p43 = scmp.ne.s32.totalorder %s32, %s35
    %p44 = scmp.eq.s32.totalorder %s27, 6
    %p45 = por %p43, %p44
    %p46 = scmp.ne.s32.totalorder %s35, %s36
    %p47 = scmp.eq.s32.totalorder %s27, 0
    %p48 = por %p46, %p47
    %p49 = scmp.ne.s32.totalorder %s35, %s36
    %p50 = scmp.eq.s32.totalorder %s28, 6
    %p51 = por %p49, %p50
    %p53 = scmp.ne.s32.totalorder %s36, %s52
    %p54 = scmp.eq.s32.totalorder %s28, 0
    %p55 = por %p53, %p54
    %s57 = sadd.s32 %s56, 1
    %p60 = scmp.eq.s32.totalorder %s22, 6
    %p61 = scmp.ne.s32.totalorder %s56, %s58
    %p62 = scmp.eq.s32.totalorder %s22, 0
    %p63 = por %p61, %p62
    %p64 = scmp.ne.s32.totalorder %s56, %s58
    %p65 = scmp.eq.s32.totalorder %s27, 6
    %p66 = por %p64, %p65
    %p67 = scmp.ne.s32.totalorder %s58, %s59
    %p68 = scmp.eq.s32.totalorder %s27, 0
    %p69 = por %p67, %p68
    %p70 = scmp.ne.s32.totalorder %s58, %s59
    %p71 = scmp.eq.s32.totalorder %s28, 6
    %p72 = por %p70, %p71
    %p74 = scmp.ne.s32.totalorder %s59, %s73
    %p75 = scmp.eq.s32.totalorder %s28, 0
    %p76 = por %p74, %p75
    %s78 = sadd.s32 %s77, 1
    %p81 = scmp.eq.s32.totalorder %s22, 6
    %p82 = scmp.ne.s32.totalorder %s77, %s79
    %p83 = scmp.eq.s32.totalorder %s22, 0
    %p84 = por %p82, %p83
    %p85 = scmp.ne.s32.totalorder %s77, %s79
    %p86 = scmp.eq.s32.totalorder %s27, 6
    %p87 = por %p85, %p86
    %p88 = scmp.ne.s32.totalorder %s79, %s80
    %p89 = scmp.eq.s32.totalorder %s27, 0
    %p90 = por %p88, %p89
    %p91 = scmp.ne.s32.totalorder %s79, %s80
    %p92 = scmp.eq.s32.totalorder %s28, 6
    %p93 = por %p91, %p92
    %p95 = scmp.ne.s32.totalorder %s80, %s94
    %p96 = scmp.eq.s32.totalorder %s28, 0
    %p97 = por %p95, %p96
    %s99 = sadd.s32 %s98, 1
    %p102 = scmp.eq.s32.totalorder %s22, 6
    %p103 = scmp.ne.s32.totalorder %s98, %s100
    %p104 = scmp.eq.s32.totalorder %s22, 0
    %p105 = por %p103, %p104
    %p106 = scmp.ne.s32.totalorder %s98, %s100
    %p107 = scmp.eq.s32.totalorder %s27, 6
    %p108 = por %p106, %p107
    %p109 = scmp.ne.s32.totalorder %s100, %s101
    %p110 = scmp.eq.s32.totalorder %s27, 0
    %p111 = por %p109, %p110
    %p112 = scmp.ne.s32.totalorder %s100, %s101
    %p113 = scmp.eq.s32.totalorder %s28, 6
    %p114 = por %p112, %p113
    %p116 = scmp.ne.s32.totalorder %s101, %s115
    %p117 = scmp.eq.s32.totalorder %s28, 0
    %p118 = por %p116, %p117
    %s120 = sadd.s32 %s119, 1
    %p123 = scmp.eq.s32.totalorder %s22, 6
    %p124 = scmp.ne.s32.totalorder %s119, %s121
    %p125 = scmp.eq.s32.totalorder %s22, 0
    %p126 = por %p124, %p125
    %p127 = scmp.ne.s32.totalorder %s119, %s121
    %p128 = scmp.eq.s32.totalorder %s27, 6
    %p129 = por %p127, %p128
    %p130 = scmp.ne.s32.totalorder %s121, %s122
    %p131 = scmp.eq.s32.totalorder %s27, 0
    %p132 = por %p130, %p131
    %p133 = scmp.ne.s32.totalorder %s121, %s122
    %p134 = scmp.eq.s32.totalorder %s28, 6
    %p135 = por %p133, %p134
    %p137 = scmp.ne.s32.totalorder %s122, %s136
    %p138 = scmp.eq.s32.totalorder %s28, 0
    %p139 = por %p137, %p138
    %s141 = sadd.s32 %s140, 1
    %p144 = scmp.eq.s32.totalorder %s22, 6
    %p145 = scmp.ne.s32.totalorder %s140, %s142
    %p146 = scmp.eq.s32.totalorder %s22, 0
    %p147 = por %p145, %p146
    %p148 = scmp.ne.s32.totalorder %s140, %s142
    %p149 = scmp.eq.s32.totalorder %s27, 6
    %p150 = por %p148, %p149
    %p151 = scmp.ne.s32.totalorder %s142, %s143
    %p152 = scmp.eq.s32.totalorder %s27, 0
    %p153 = por %p151, %p152
    %p154 = scmp.ne.s32.totalorder %s142, %s143
    %p155 = scmp.eq.s32.totalorder %s28, 6
    %p156 = por %p154, %p155
    %p158 = scmp.ne.s32.totalorder %s143, %s157
    %p159 = scmp.eq.s32.totalorder %s28, 0
    %p160 = por %p158, %p159
    %s162 = sadd.s32 %s161, 1
    %p165 = scmp.eq.s32.totalorder %s22, 6
    %p166 = scmp.ne.s32.totalorder %s161, %s163
    %p167 = scmp.eq.s32.totalorder %s22, 0
    %p168 = por %p166, %p167
    %p169 = scmp.ne.s32.totalorder %s161, %s163
    %p170 = scmp.eq.s32.totalorder %s27, 6
    %p171 = por %p169, %p170
    %p172 = scmp.ne.s32.totalorder %s163, %s164
    %p173 = scmp.eq.s32.totalorder %s27, 0
    %p174 = por %p172, %p173
    %p175 = scmp.ne.s32.totalorder %s163, %s164
    %p176 = scmp.eq.s32.totalorder %s28, 6
    %p177 = por %p175, %p176
    %p179 = scmp.ne.s32.totalorder %s164, %s178
    %p180 = scmp.eq.s32.totalorder %s28, 0
    %p181 = por %p179, %p180
    %s183 = sadd.s32 %s182, 1
    %p186 = scmp.eq.s32.totalorder %s22, 6
    %p187 = scmp.ne.s32.totalorder %s182, %s184
    %p188 = scmp.eq.s32.totalorder %s22, 0
    %p189 = por %p187, %p188
    %p190 = scmp.ne.s32.totalorder %s182, %s184
    %p191 = scmp.eq.s32.totalorder %s27, 6
    %p192 = por %p190, %p191
    %p193 = scmp.ne.s32.totalorder %s184, %s185
    %p194 = scmp.eq.s32.totalorder %s27, 0
    %p195 = por %p193, %p194
    %p196 = scmp.ne.s32.totalorder %s184, %s185
    %p197 = scmp.eq.s32.totalorder %s28, 6
    %p198 = por %p196, %p197
    %p200 = scmp.ne.s32.totalorder %s185, %s199
    %p201 = scmp.eq.s32.totalorder %s28, 0
    %p202 = por %p200, %p201
    %s204 = sadd.s32 %s203, 1
    %p207 = scmp.eq.s32.totalorder %s22, 6
    %p208 = scmp.ne.s32.totalorder %s203, %s205
    %p209 = scmp.eq.s32.totalorder %s22, 0
    %p210 = por %p208, %p209
    %p211 = scmp.ne.s32.totalorder %s203, %s205
    %p212 = scmp.eq.s32.totalorder %s27, 6
    %p213 = por %p211, %p212
    %p214 = scmp.ne.s32.totalorder %s205, %s206
    %p215 = scmp.eq.s32.totalorder %s27, 0
    %p216 = por %p214, %p215
    %p217 = scmp.ne.s32.totalorder %s205, %s206
    %p218 = scmp.eq.s32.totalorder %s28, 6
    %p219 = por %p217, %p218
    %p221 = scmp.ne.s32.totalorder %s206, %s220
    %p222 = scmp.eq.s32.totalorder %s28, 0
    %p223 = por %p221, %p222
    %s224 = ssub.s32 %s22, %s29
    %p225 = scmp.eq.s32.totalorder %s224, 0
    %s227 = sadd.s32 %s226, 1
    %s228 = scalar_select %p225, %s226, %s227
    %p231 = pneg %p225
    %p232 = scmp.eq.s32.totalorder %s22, 6
    %p233 = por %p231, %p232
    %p234 = scmp.ne.s32.totalorder %s226, %s229
    %p235 = scmp.eq.s32.totalorder %s22, 0
    %p236 = por %p234, %p235
    %p237 = scmp.ne.s32.totalorder %s226, %s229
    %p238 = scmp.eq.s32.totalorder %s27, 6
    %p239 = por %p237, %p238
    %p240 = scmp.ne.s32.totalorder %s229, %s230
    %p241 = scmp.eq.s32.totalorder %s27, 0
    %p242 = por %p240, %p241
    %p243 = scmp.ne.s32.totalorder %s229, %s230
    %p244 = scmp.eq.s32.totalorder %s28, 6
    %p245 = por %p243, %p244
    %p247 = scmp.ne.s32.totalorder %s230, %s246
    %p248 = scmp.eq.s32.totalorder %s28, 0
    %p249 = por %p247, %p248
    %p250 = scmp.le.s32.totalorder 1, %s22
    %p251 = scmp.lt.s32.totalorder %s22, 8
    %p252 = pnand %p250, %p251
    %p253 = pneg %p252
    // Predicated region
    $region9: #{seq2seq_forward.3} parent=5 // pred_check
      _
    $region10: #{seq2seq_forward.3} parent=5 // pred_check_branch
      %255 = sbr.rel (%p252) target = $region12
    $region11: #{seq2seq_forward.3} parent=5 // pred_region
      %s256 = ssub.s32 %s22, 1
      // Predicated region
      $region13: #{seq2seq_forward.3} parent=11 // pred_check
        %p257 = pneg %p69
      $region14: #{seq2seq_forward.3} parent=11 // pred_check_branch
        %259 = sbr.rel (%p257) target = $region16
      $region15: #{seq2seq_forward.3} parent=11 // pred_region
        _
      $region16: #{seq2seq_forward.3} parent=11 // pred_fallthru
        _
      // Predicated region
      $region17: #{seq2seq_forward.3} parent=11 // pred_check
        %p260 = pneg %p90
      $region18: #{seq2seq_forward.3} parent=11 // pred_check_branch
        %262 = sbr.rel (%p260) target = $region20
      $region19: #{seq2seq_forward.3} parent=11 // pred_region
        _
      $region20: #{seq2seq_forward.3} parent=11 // pred_fallthru
        _
      // Predicated region
      $region21: #{seq2seq_forward.3} parent=11 // pred_check
        %p263 = pneg %p111
      $region22: #{seq2seq_forward.3} parent=11 // pred_check_branch
        %265 = sbr.rel (%p263) target = $region24
      $region23: #{seq2seq_forward.3} parent=11 // pred_region
        _
      $region24: #{seq2seq_forward.3} parent=11 // pred_fallthru
        _
      // Predicated region
      $region25: #{seq2seq_forward.3} parent=11 // pred_check
        %p266 = pneg %p132
      $region26: #{seq2seq_forward.3} parent=11 // pred_check_branch
        %268 = sbr.rel (%p266) target = $region28
      $region27: #{seq2seq_forward.3} parent=11 // pred_region
        _
      $region28: #{seq2seq_forward.3} parent=11 // pred_fallthru
        _
      // Predicated region
      $region29: #{seq2seq_forward.3} parent=11 // pred_check
        %p269 = pneg %p153
      $region30: #{seq2seq_forward.3} parent=11 // pred_check_branch
        %271 = sbr.rel (%p269) target = $region32
      $region31: #{seq2seq_forward.3} parent=11 // pred_region
        _
      $region32: #{seq2seq_forward.3} parent=11 // pred_fallthru
        _
      // Predicated region
      $region33: #{seq2seq_forward.3} parent=11 // pred_check
        %p272 = pneg %p174
      $region34: #{seq2seq_forward.3} parent=11 // pred_check_branch
        %274 = sbr.rel (%p272) target = $region36
      $region35: #{seq2seq_forward.3} parent=11 // pred_region
        _
      $region36: #{seq2seq_forward.3} parent=11 // pred_fallthru
        _
      // Predicated region
      $region37: #{seq2seq_forward.3} parent=11 // pred_check
        %p275 = pneg %p195
      $region38: #{seq2seq_forward.3} parent=11 // pred_check_branch
        %277 = sbr.rel (%p275) target = $region40
      $region39: #{seq2seq_forward.3} parent=11 // pred_region
        _
      $region40: #{seq2seq_forward.3} parent=11 // pred_fallthru
        _
      // Predicated region
      $region41: #{seq2seq_forward.3} parent=11 // pred_check
        %p278 = pneg %p216
      $region42: #{seq2seq_forward.3} parent=11 // pred_check_branch
        %280 = sbr.rel (%p278) target = $region44
      $region43: #{seq2seq_forward.3} parent=11 // pred_region
        _
      $region44: #{seq2seq_forward.3} parent=11 // pred_fallthru
        _
    $region12: #{seq2seq_forward.3} parent=5 // pred_fallthru
      _
    %p281 = scmp.lt.s32.totalorder %s22, 7
    // Predicated region
    $region45: #{seq2seq_forward.3} parent=5 // pred_check
      %p282 = pneg %p281
    $region46: #{seq2seq_forward.3} parent=5 // pred_check_branch
      %284 = sbr.rel (%p282) target = $region48
    $region47: #{seq2seq_forward.3} parent=5 // pred_region
      // Predicated region
      $region49: #{seq2seq_forward.3} parent=47 // pred_check
        %p285 = pneg %p42
      $region50: #{seq2seq_forward.3} parent=47 // pred_check_branch
        %287 = sbr.rel (%p285) target = $region52
      $region51: #{seq2seq_forward.3} parent=47 // pred_region
        %p288 = scmp.lt.s32.totalorder %s22, 7
        %s289 = scalar_select %p288, %s22, 7
        %s290 = smul.addr %s289, 8
        %s291 = scalar_lea.vmem %s1, %s290
      $region52: #{seq2seq_forward.3} parent=47 // pred_fallthru
        _
    $region48: #{seq2seq_forward.3} parent=5 // pred_fallthru
      _
    %p292 = scmp.le.s32.totalorder 1, %s22
    %p293 = scmp.lt.s32.totalorder %s22, 8
    %p294 = pnand %p292, %p293
    %p295 = pneg %p294
    // Predicated region
    $region53: #{seq2seq_forward.3} parent=5 // pred_check
      _
    $region54: #{seq2seq_forward.3} parent=5 // pred_check_branch
      %297 = sbr.rel (%p294) target = $region56
    $region55: #{seq2seq_forward.3} parent=5 // pred_region
      %s298 = ssub.s32 %s22, 1
      %p299 = scmp.lt.s32.totalorder %s27, 7
      %s300 = scalar_select %p299, %s27, 7
      %s301 = smul.addr %s300, 8
      %s302 = scalar_lea.vmem %s1, %s301
      %p303 = pneg %p48
      %p304 = pneg %p45
      %p305 = pneg %p69
      %p306 = pneg %p66
      %p307 = pneg %p90
      %p308 = pneg %p87
      %p309 = pneg %p111
      %p310 = pneg %p108
      %p311 = pneg %p132
      %p312 = pneg %p129
      %p313 = pneg %p153
      %p314 = pneg %p150
      %p315 = pneg %p174
      %p316 = pneg %p171
      %p317 = pneg %p195
      %p318 = pneg %p192
      %p319 = pneg %p216
      %p320 = pneg %p213
      %p321 = pneg %p242
      %p322 = pneg %p239
      %p323 = scmp.lt.s32.totalorder %s27, 6
      %s324 = scalar_select %p323, %s27, 6
      %s325 = smul.addr %s324, 8
      %s326 = scalar_lea.vmem %s10, %s325
      %p327 = scmp.lt.s32.totalorder %s27, 7
      %s328 = scalar_select %p327, %s27, 7
      %s329 = smul.addr %s328, 8
      %s330 = scalar_lea.vmem %s1, %s329
      %p331 = scmp.lt.s32.totalorder %s27, 6
      %s332 = scalar_select %p331, %s27, 6
      %s333 = smul.addr %s332, 8
      %s334 = scalar_lea.vmem %s10, %s333
      %p335 = scmp.eq.s32.totalorder %s27, 0
      // Predicated region
      $region57: #{seq2seq_forward.3} parent=55 // pred_check
        %p336 = pneg %p335
      $region58: #{seq2seq_forward.3} parent=55 // pred_check_branch
        %338 = sbr.rel (%p336) target = $region60
      $region59: #{seq2seq_forward.3} parent=55 // pred_region
        %v339 = vld [vmem:[%s8] sm:$0xff]
        %340 = vst [vmem:[#allocation2] sm:$0xff] %v339
        %v341 = vld [vmem:[%s9] sm:$0xff]
        %342 = vst [vmem:[#allocation3] sm:$0xff] %v341
        %vm343 = vcmask 7168
        %344 = vst.msk [vmem:[#allocation4] sm:$0xff] %vm343, 0
      $region60: #{seq2seq_forward.3} parent=55 // pred_fallthru
        _
      %s345 = sld [smem:[#allocation6 + %s27]]
      %p346 = scmp.ne.s32.totalorder %s345, 0
      %p347 = por %p335, %p346
      %v348 = vld [vmem:[%s330] sm:$0xff]
      %v349 = vld [vmem:[#allocation4] sm:$0xff]
      %s350 = scalar_select %p347, 1, 0
      %v351 = vstv %s350
      %vm352 = vcmp.eq.s32.totalorder %v351, 1
      %v353 = vsel %vm352, %v348, %v349
      %v354 = vlaneseq
      %v355 = vand.u32 %v354, 127
      %356 = vset.pattern.permute.xlu0 0
      %357 = vperm.xlu0 %356, %v353
      %v358 = vpop.permute.xlu0 %357
      %vm359 = vcmp.eq.s32.totalorder %v358, %v355
      %v360 = vsel %vm359, 1, 0
      %v361 = vcvt.s32.f32 %v360
      %v362 = vld [vmem:[%s2] sm:$0xff]
      %v363 = vld [vmem:[%s2 + $0x8] sm:$0xff]
      %vm364 = vcmask 130048
      %v366 = vsel %vm364, %v361, 0
      %368 = vmatprep.subr.mxu0 0.0
      %369 = vmatpush1.msra.mxu0 %v362
      %370 = vmatprep.subr.mxu0 0.0
      %371 = vmatpush1.msra.mxu0 %v363
      %372 = vmatprep.subr.mxu0 0.0
      %373 = vmatpush1.msra.mxu0 0.0
      %374 = vmatprep.subr.mxu0 0.0
      %375 = vmatpush1.msra.mxu0 0.0
      %376 = vmatprep.subr.mxu0 0.0
      %377 = vmatpush1.msra.mxu0 0.0
      %378 = vmatprep.subr.mxu0 0.0
      %379 = vmatpush1.msra.mxu0 0.0
      %380 = vmatprep.subr.mxu0 0.0
      %381 = vmatpush1.msra.mxu0 0.0
      %382 = vmatprep.subr.mxu0 0.0
      %383 = vmatpush1.msra.mxu0 0.0
      %384 = vmatprep.subr.mxu0 0.0
      %385 = vmatpush1.msra.mxu0 0.0
      %386 = vmatprep.subr.mxu0 0.0
      %387 = vmatpush1.msra.mxu0 0.0
      %388 = vmatprep.subr.mxu0 0.0
      %389 = vmatpush1.msra.mxu0 0.0
      %390 = vmatprep.subr.mxu0 0.0
      %391 = vmatpush1.msra.mxu0 0.0
      %392 = vmatprep.subr.mxu0 0.0
      %393 = vmatpush1.msra.mxu0 0.0
      %394 = vmatprep.subr.mxu0 0.0
      %395 = vmatpush1.msra.mxu0 0.0
      %396 = vmatprep.subr.mxu0 0.0
      %397 = vmatpush1.msra.mxu0 0.0
      %398 = vmatprep.subr.mxu0 0.0
      %399 = vmatpush1.msra.mxu0 0.0
      %400 = vmatprep.subr.mxu0 0.0
      %401 = vmatpush1.msra.mxu0 0.0
      %402 = vmatprep.subr.mxu0 0.0
      %403 = vmatpush1.msra.mxu0 0.0
      %404 = vmatprep.subr.mxu0 0.0
      %405 = vmatpush1.msra.mxu0 0.0
      %406 = vmatprep.subr.mxu0 0.0
      %407 = vmatpush1.msra.mxu0 0.0
      %408 = vmatprep.subr.mxu0 0.0
      %409 = vmatpush1.msra.mxu0 0.0
      %410 = vmatprep.subr.mxu0 0.0
      %411 = vmatpush1.msra.mxu0 0.0
      %412 = vmatprep.subr.mxu0 0.0
      %413 = vmatpush1.msra.mxu0 0.0
      %414 = vmatprep.subr.mxu0 0.0
      %415 = vmatpush1.msra.mxu0 0.0
      %416 = vmatprep.subr.mxu0 0.0
      %417 = vmatpush1.msra.mxu0 0.0
      %418 = vmatprep.subr.mxu0 0.0
      %419 = vmatpush1.msra.mxu0 0.0
      %420 = vmatprep.subr.mxu0 0.0
      %421 = vmatpush1.msra.mxu0 0.0
      %422 = vmatprep.subr.mxu0 0.0
      %423 = vmatpush1.msra.mxu0 0.0
      %424 = vmatprep.subr.mxu0 0.0
      %425 = vmatpush1.msra.mxu0 0.0
      %426 = vmatprep.subr.mxu0 0.0
      %427 = vmatpush1.msra.mxu0 0.0
      %428 = vmatprep.subr.mxu0 0.0
      %429 = vmatpush1.msra.mxu0 0.0
      %430 = vmatprep.subr.mxu0 0.0
      %431 = vmatpush1.msra.mxu0 0.0
      %432 = vmatprep.mubr.f32.mxu0 0.0
      %433 = vmatmul.mubr.f32.gmra.mrb[0].mxu0 %v366
      %v434 = vpop.f32.mrb[0].mxu0
      %v435 = vadd.f32 0.0, %v434
      %v436 = vpop.f32.mrb[0].mxu0
      %437 = vdwg.mxu0
      %v438 = vld [vmem:[#allocation2] sm:$0xff]
      %v439 = vld [vmem:[#allocation3] sm:$0xff]
      %v440 = vld [vmem:[%s3] sm:$0xff]
      %v441 = vld [vmem:[%s3 + $0x8] sm:$0xff]
      %v442 = vld [vmem:[%s3 + $0x10] sm:$0xff]
      %v443 = vld [vmem:[%s3 + $0x18] sm:$0xff]
      %v444 = vld [vmem:[%s3 + $0x20] sm:$0xff]
      %v445 = vld [vmem:[%s3 + $0x28] sm:$0xff]
      %v446 = vld [vmem:[%s3 + $0x30] sm:$0xff]
      %v447 = vld [vmem:[%s3 + $0x38] sm:$0xff]
      %v448 = vld [vmem:[%s3 + $0x40] sm:$0xff]
      %v449 = vld [vmem:[%s3 + $0x48] sm:$0xff]
      %v450 = vld [vmem:[%s3 + $0x50] sm:$0xff]
      %v451 = vld [vmem:[%s3 + $0x58] sm:$0xff]
      %v452 = vld [vmem:[%s3 + $0x60] sm:$0xff]
      %v453 = vld [vmem:[%s3 + $0x68] sm:$0xff]
      %v454 = vld [vmem:[%s3 + $0x70] sm:$0xff]
      %v455 = vld [vmem:[%s3 + $0x78] sm:$0xff]
      %v456 = vld [vmem:[%s3 + $0x80] sm:$0xff]
      %v457 = vld [vmem:[%s3 + $0x88] sm:$0xff]
      %v458 = vld [vmem:[%s3 + $0x90] sm:$0xff]
      %v459 = vld [vmem:[%s3 + $0x98] sm:$0xff]
      %v460 = vld [vmem:[%s3 + $0xa0] sm:$0xff]
      %v461 = vld [vmem:[%s3 + $0xa8] sm:$0xff]
      %v462 = vld [vmem:[%s3 + $0xb0] sm:$0xff]
      %v463 = vld [vmem:[%s3 + $0xb8] sm:$0xff]
      %v464 = vld [vmem:[%s3 + $0xc0] sm:$0xff]
      %v465 = vld [vmem:[%s3 + $0xc8] sm:$0xff]
      %v466 = vld [vmem:[%s3 + $0xd0] sm:$0xff]
      %v467 = vld [vmem:[%s3 + $0xd8] sm:$0xff]
      %v468 = vld [vmem:[%s3 + $0xe0] sm:$0xff]
      %v469 = vld [vmem:[%s3 + $0xe8] sm:$0xff]
      %v470 = vld [vmem:[%s3 + $0xf0] sm:$0xff]
      %v471 = vld [vmem:[%s3 + $0xf8] sm:$0xff]
      %v472 = vld [vmem:[%s3 + $0x100] sm:$0xff]
      %v473 = vld [vmem:[%s3 + $0x108] sm:$0xff]
      %v474 = vld [vmem:[%s3 + $0x110] sm:$0xff]
      %v475 = vld [vmem:[%s3 + $0x118] sm:$0xff]
      %v476 = vld [vmem:[%s3 + $0x120] sm:$0xff]
      %v477 = vld [vmem:[%s3 + $0x128] sm:$0xff]
      %v478 = vld [vmem:[%s3 + $0x130] sm:$0xff]
      %v479 = vld [vmem:[%s3 + $0x138] sm:$0xff]
      %v480 = vld [vmem:[%s3 + $0x140] sm:$0xff]
      %v481 = vld [vmem:[%s3 + $0x148] sm:$0xff]
      %v482 = vld [vmem:[%s3 + $0x150] sm:$0xff]
      %v483 = vld [vmem:[%s3 + $0x158] sm:$0xff]
      %v484 = vld [vmem:[%s3 + $0x160] sm:$0xff]
      %v485 = vld [vmem:[%s3 + $0x168] sm:$0xff]
      %v486 = vld [vmem:[%s3 + $0x170] sm:$0xff]
      %v487 = vld [vmem:[%s3 + $0x178] sm:$0xff]
      %v488 = vld [vmem:[%s3 + $0x180] sm:$0xff]
      %v489 = vld [vmem:[%s3 + $0x188] sm:$0xff]
      %v490 = vld [vmem:[%s3 + $0x190] sm:$0xff]
      %v491 = vld [vmem:[%s3 + $0x198] sm:$0xff]
      %v492 = vld [vmem:[%s3 + $0x1a0] sm:$0xff]
      %v493 = vld [vmem:[%s3 + $0x1a8] sm:$0xff]
      %v494 = vld [vmem:[%s3 + $0x1b0] sm:$0xff]
      %v495 = vld [vmem:[%s3 + $0x1b8] sm:$0xff]
      %v496 = vld [vmem:[%s3 + $0x1c0] sm:$0xff]
      %v497 = vld [vmem:[%s3 + $0x1c8] sm:$0xff]
      %v498 = vld [vmem:[%s3 + $0x1d0] sm:$0xff]
      %v499 = vld [vmem:[%s3 + $0x1d8] sm:$0xff]
      %v500 = vld [vmem:[%s3 + $0x1e0] sm:$0xff]
      %v501 = vld [vmem:[%s3 + $0x1e8] sm:$0xff]
      %v502 = vld [vmem:[%s3 + $0x1f0] sm:$0xff]
      %v503 = vld [vmem:[%s3 + $0x1f8] sm:$0xff]
      %v504 = vld [vmem:[%s4] sm:$0xff]
      %v505 = vld [vmem:[%s4 + $0x8] sm:$0xff]
      %v506 = vld [vmem:[%s4 + $0x10] sm:$0xff]
      %v507 = vld [vmem:[%s4 + $0x18] sm:$0xff]
      %v508 = vld [vmem:[%s4 + $0x20] sm:$0xff]
      %v509 = vld [vmem:[%s4 + $0x28] sm:$0xff]
      %v510 = vld [vmem:[%s4 + $0x30] sm:$0xff]
      %v511 = vld [vmem:[%s4 + $0x38] sm:$0xff]
      %v512 = vld [vmem:[%s4 + $0x40] sm:$0xff]
      %v513 = vld [vmem:[%s4 + $0x48] sm:$0xff]
      %v514 = vld [vmem:[%s4 + $0x50] sm:$0xff]
      %v515 = vld [vmem:[%s4 + $0x58] sm:$0xff]
      %v516 = vld [vmem:[%s4 + $0x60] sm:$0xff]
      %v517 = vld [vmem:[%s4 + $0x68] sm:$0xff]
      %v518 = vld [vmem:[%s4 + $0x70] sm:$0xff]
      %v519 = vld [vmem:[%s4 + $0x78] sm:$0xff]
      %v520 = vld [vmem:[%s4 + $0x80] sm:$0xff]
      %v521 = vld [vmem:[%s4 + $0x88] sm:$0xff]
      %v522 = vld [vmem:[%s4 + $0x90] sm:$0xff]
      %v523 = vld [vmem:[%s4 + $0x98] sm:$0xff]
      %v524 = vld [vmem:[%s4 + $0xa0] sm:$0xff]
      %v525 = vld [vmem:[%s4 + $0xa8] sm:$0xff]
      %v526 = vld [vmem:[%s4 + $0xb0] sm:$0xff]
      %v527 = vld [vmem:[%s4 + $0xb8] sm:$0xff]
      %v528 = vld [vmem:[%s4 + $0xc0] sm:$0xff]
      %v529 = vld [vmem:[%s4 + $0xc8] sm:$0xff]
      %v530 = vld [vmem:[%s4 + $0xd0] sm:$0xff]
      %v531 = vld [vmem:[%s4 + $0xd8] sm:$0xff]
      %v532 = vld [vmem:[%s4 + $0xe0] sm:$0xff]
      %v533 = vld [vmem:[%s4 + $0xe8] sm:$0xff]
      %v534 = vld [vmem:[%s4 + $0xf0] sm:$0xff]
      %v535 = vld [vmem:[%s4 + $0xf8] sm:$0xff]
      %v536 = vld [vmem:[%s4 + $0x100] sm:$0xff]
      %v537 = vld [vmem:[%s4 + $0x108] sm:$0xff]
      %v538 = vld [vmem:[%s4 + $0x110] sm:$0xff]
      %v539 = vld [vmem:[%s4 + $0x118] sm:$0xff]
      %v540 = vld [vmem:[%s4 + $0x120] sm:$0xff]
      %v541 = vld [vmem:[%s4 + $0x128] sm:$0xff]
      %v542 = vld [vmem:[%s4 + $0x130] sm:$0xff]
      %v543 = vld [vmem:[%s4 + $0x138] sm:$0xff]
      %v544 = vld [vmem:[%s4 + $0x140] sm:$0xff]
      %v545 = vld [vmem:[%s4 + $0x148] sm:$0xff]
      %v546 = vld [vmem:[%s4 + $0x150] sm:$0xff]
      %v547 = vld [vmem:[%s4 + $0x158] sm:$0xff]
      %v548 = vld [vmem:[%s4 + $0x160] sm:$0xff]
      %v549 = vld [vmem:[%s4 + $0x168] sm:$0xff]
      %v550 = vld [vmem:[%s4 + $0x170] sm:$0xff]
      %v551 = vld [vmem:[%s4 + $0x178] sm:$0xff]
      %v552 = vld [vmem:[%s4 + $0x180] sm:$0xff]
      %v553 = vld [vmem:[%s4 + $0x188] sm:$0xff]
      %v554 = vld [vmem:[%s4 + $0x190] sm:$0xff]
      %v555 = vld [vmem:[%s4 + $0x198] sm:$0xff]
      %v556 = vld [vmem:[%s4 + $0x1a0] sm:$0xff]
      %v557 = vld [vmem:[%s4 + $0x1a8] sm:$0xff]
      %v558 = vld [vmem:[%s4 + $0x1b0] sm:$0xff]
      %v559 = vld [vmem:[%s4 + $0x1b8] sm:$0xff]
      %v560 = vld [vmem:[%s4 + $0x1c0] sm:$0xff]
      %v561 = vld [vmem:[%s4 + $0x1c8] sm:$0xff]
      %v562 = vld [vmem:[%s4 + $0x1d0] sm:$0xff]
      %v563 = vld [vmem:[%s4 + $0x1d8] sm:$0xff]
      %v564 = vld [vmem:[%s4 + $0x1e0] sm:$0xff]
      %v565 = vld [vmem:[%s4 + $0x1e8] sm:$0xff]
      %v566 = vld [vmem:[%s4 + $0x1f0] sm:$0xff]
      %v567 = vld [vmem:[%s4 + $0x1f8] sm:$0xff]
      %568 = vmatprep.subr.mxu0 %v505
      %569 = vmatpush1.msra.mxu0 %v504
      %570 = vmatprep.subr.mxu0 %v509
      %571 = vmatpush1.msra.mxu0 %v508
      %572 = vmatprep.subr.mxu0 %v513
      %573 = vmatpush1.msra.mxu0 %v512
      %574 = vmatprep.subr.mxu0 %v517
      %575 = vmatpush1.msra.mxu0 %v516
      %576 = vmatprep.subr.mxu0 %v521
      %577 = vmatpush1.msra.mxu0 %v520
      %578 = vmatprep.subr.mxu0 %v525
      %579 = vmatpush1.msra.mxu0 %v524
      %580 = vmatprep.subr.mxu0 %v529
      %581 = vmatpush1.msra.mxu0 %v528
      %582 = vmatprep.subr.mxu0 %v533
      %583 = vmatpush1.msra.mxu0 %v532
      %584 = vmatprep.subr.mxu0 %v537
      %585 = vmatpush1.msra.mxu0 %v536
      %586 = vmatprep.subr.mxu0 %v541
      %587 = vmatpush1.msra.mxu0 %v540
      %588 = vmatprep.subr.mxu0 %v545
      %589 = vmatpush1.msra.mxu0 %v544
      %590 = vmatprep.subr.mxu0 %v549
      %591 = vmatpush1.msra.mxu0 %v548
      %592 = vmatprep.subr.mxu0 %v553
      %593 = vmatpush1.msra.mxu0 %v552
      %594 = vmatprep.subr.mxu0 %v557
      %595 = vmatpush1.msra.mxu0 %v556
      %596 = vmatprep.subr.mxu0 %v561
      %597 = vmatpush1.msra.mxu0 %v560
      %598 = vmatprep.subr.mxu0 %v565
      %599 = vmatpush1.msra.mxu0 %v564
      %600 = vmatprep.subr.mxu0 0.0
      %601 = vmatpush1.msra.mxu0 0.0
      %602 = vmatprep.subr.mxu0 0.0
      %603 = vmatpush1.msra.mxu0 0.0
      %604 = vmatprep.subr.mxu0 0.0
      %605 = vmatpush1.msra.mxu0 0.0
      %606 = vmatprep.subr.mxu0 0.0
      %607 = vmatpush1.msra.mxu0 0.0
      %608 = vmatprep.subr.mxu0 0.0
      %609 = vmatpush1.msra.mxu0 0.0
      %610 = vmatprep.subr.mxu0 0.0
      %611 = vmatpush1.msra.mxu0 0.0
      %612 = vmatprep.subr.mxu0 0.0
      %613 = vmatpush1.msra.mxu0 0.0
      %614 = vmatprep.subr.mxu0 0.0
      %615 = vmatpush1.msra.mxu0 0.0
      %616 = vmatprep.subr.mxu0 0.0
      %617 = vmatpush1.msra.mxu0 0.0
      %618 = vmatprep.subr.mxu0 0.0
      %619 = vmatpush1.msra.mxu0 0.0
      %620 = vmatprep.subr.mxu0 0.0
      %621 = vmatpush1.msra.mxu0 0.0
      %622 = vmatprep.subr.mxu0 0.0
      %623 = vmatpush1.msra.mxu0 0.0
      %624 = vmatprep.subr.mxu0 0.0
      %625 = vmatpush1.msra.mxu0 0.0
      %626 = vmatprep.subr.mxu0 0.0
      %627 = vmatpush1.msra.mxu0 0.0
      %628 = vmatprep.subr.mxu0 0.0
      %629 = vmatpush1.msra.mxu0 0.0
      %630 = vmatprep.subr.mxu0 0.0
      %631 = vmatpush1.msra.mxu0 0.0
      %632 = vmatprep.mubr.f32.mxu0 0.0
      %633 = vmatmul.mubr.f32.gmra.mrb[0].mxu0 %v438
      %v634 = vpop.f32.mrb[0].mxu0
      %v635 = vadd.f32 0.0, %v634
      %v636 = vpop.f32.mrb[0].mxu0
      %v637 = vadd.f32 0.0, %v636
      %638 = vdwg.mxu0
      %639 = vmatprep.subr.mxu0 %v507
      %640 = vmatpush1.msra.mxu0 %v506
      %641 = vmatprep.subr.mxu0 %v511
      %642 = vmatpush1.msra.mxu0 %v510
      %643 = vmatprep.subr.mxu0 %v515
      %644 = vmatpush1.msra.mxu0 %v514
      %645 = vmatprep.subr.mxu0 %v519
      %646 = vmatpush1.msra.mxu0 %v518
      %647 = vmatprep.subr.mxu0 %v523
      %648 = vmatpush1.msra.mxu0 %v522
      %649 = vmatprep.subr.mxu0 %v527
      %650 = vmatpush1.msra.mxu0 %v526
      %651 = vmatprep.subr.mxu0 %v531
      %652 = vmatpush1.msra.mxu0 %v530
      %653 = vmatprep.subr.mxu0 %v535
      %654 = vmatpush1.msra.mxu0 %v534
      %655 = vmatprep.subr.mxu0 %v539
      %656 = vmatpush1.msra.mxu0 %v538
      %657 = vmatprep.subr.mxu0 %v543
      %658 = vmatpush1.msra.mxu0 %v542
      %659 = vmatprep.subr.mxu0 %v547
      %660 = vmatpush1.msra.mxu0 %v546
      %661 = vmatprep.subr.mxu0 %v551
      %662 = vmatpush1.msra.mxu0 %v550
      %663 = vmatprep.subr.mxu0 %v555
      %664 = vmatpush1.msra.mxu0 %v554
      %665 = vmatprep.subr.mxu0 %v559
      %666 = vmatpush1.msra.mxu0 %v558
      %667 = vmatprep.subr.mxu0 %v563
      %668 = vmatpush1.msra.mxu0 %v562
      %669 = vmatprep.subr.mxu0 %v567
      %670 = vmatpush1.msra.mxu0 %v566
      %671 = vmatprep.subr.mxu0 0.0
      %672 = vmatpush1.msra.mxu0 0.0
      %673 = vmatprep.subr.mxu0 0.0
      %674 = vmatpush1.msra.mxu0 0.0
      %675 = vmatprep.subr.mxu0 0.0
      %676 = vmatpush1.msra.mxu0 0.0
      %677 = vmatprep.subr.mxu0 0.0
      %678 = vmatpush1.msra.mxu0 0.0
      %679 = vmatprep.subr.mxu0 0.0
      %680 = vmatpush1.msra.mxu0 0.0
      %681 = vmatprep.subr.mxu0 0.0
      %682 = vmatpush1.msra.mxu0 0.0
      %683 = vmatprep.subr.mxu0 0.0
      %684 = vmatpush1.msra.mxu0 0.0
      %685 = vmatprep.subr.mxu0 0.0
      %686 = vmatpush1.msra.mxu0 0.0
      %687 = vmatprep.subr.mxu0 0.0
      %688 = vmatpush1.msra.mxu0 0.0
      %689 = vmatprep.subr.mxu0 0.0
      %690 = vmatpush1.msra.mxu0 0.0
      %691 = vmatprep.subr.mxu0 0.0
      %692 = vmatpush1.msra.mxu0 0.0
      %693 = vmatprep.subr.mxu0 0.0
      %694 = vmatpush1.msra.mxu0 0.0
      %695 = vmatprep.subr.mxu0 0.0
      %696 = vmatpush1.msra.mxu0 0.0
      %697 = vmatprep.subr.mxu0 0.0
      %698 = vmatpush1.msra.mxu0 0.0
      %699 = vmatprep.subr.mxu0 0.0
      %700 = vmatpush1.msra.mxu0 0.0
      %701 = vmatprep.subr.mxu0 0.0
      %702 = vmatpush1.msra.mxu0 0.0
      %703 = vmatprep.mubr.f32.mxu0 0.0
      %704 = vmatmul.mubr.f32.gmra.mrb[0].mxu0 %v438
      %v705 = vpop.f32.mrb[0].mxu0
      %v706 = vadd.f32 0.0, %v705
      %v707 = vpop.f32.mrb[0].mxu0
      %v708 = vadd.f32 0.0, %v707
      %709 = vdwg.mxu0
      %710 = vmatprep.subr.mxu0 %v441
      %711 = vmatpush1.msra.mxu0 %v440
      %712 = vmatprep.subr.mxu0 %v445
      %713 = vmatpush1.msra.mxu0 %v444
      %714 = vmatprep.subr.mxu0 %v449
      %715 = vmatpush1.msra.mxu0 %v448
      %716 = vmatprep.subr.mxu0 %v453
      %717 = vmatpush1.msra.mxu0 %v452
      %718 = vmatprep.subr.mxu0 %v457
      %719 = vmatpush1.msra.mxu0 %v456
      %720 = vmatprep.subr.mxu0 %v461
      %721 = vmatpush1.msra.mxu0 %v460
      %722 = vmatprep.subr.mxu0 %v465
      %723 = vmatpush1.msra.mxu0 %v464
      %724 = vmatprep.subr.mxu0 %v469
      %725 = vmatpush1.msra.mxu0 %v468
      %726 = vmatprep.subr.mxu0 %v473
      %727 = vmatpush1.msra.mxu0 %v472
      %728 = vmatprep.subr.mxu0 %v477
      %729 = vmatpush1.msra.mxu0 %v476
      %730 = vmatprep.subr.mxu0 %v481
      %731 = vmatpush1.msra.mxu0 %v480
      %732 = vmatprep.subr.mxu0 %v485
      %733 = vmatpush1.msra.mxu0 %v484
      %734 = vmatprep.subr.mxu0 %v489
      %735 = vmatpush1.msra.mxu0 %v488
      %736 = vmatprep.subr.mxu0 %v493
      %737 = vmatpush1.msra.mxu0 %v492
      %738 = vmatprep.subr.mxu0 %v497
      %739 = vmatpush1.msra.mxu0 %v496
      %740 = vmatprep.subr.mxu0 %v501
      %741 = vmatpush1.msra.mxu0 %v500
      %742 = vmatprep.subr.mxu0 0.0
      %743 = vmatpush1.msra.mxu0 0.0
      %744 = vmatprep.subr.mxu0 0.0
      %745 = vmatpush1.msra.mxu0 0.0
      %746 = vmatprep.subr.mxu0 0.0
      %747 = vmatpush1.msra.mxu0 0.0
      %748 = vmatprep.subr.mxu0 0.0
      %749 = vmatpush1.msra.mxu0 0.0
      %750 = vmatprep.subr.mxu0 0.0
      %751 = vmatpush1.msra.mxu0 0.0
      %752 = vmatprep.subr.mxu0 0.0
      %753 = vmatpush1.msra.mxu0 0.0
      %754 = vmatprep.subr.mxu0 0.0
      %755 = vmatpush1.msra.mxu0 0.0
      %756 = vmatprep.subr.mxu0 0.0
      %757 = vmatpush1.msra.mxu0 0.0
      %758 = vmatprep.subr.mxu0 0.0
      %759 = vmatpush1.msra.mxu0 0.0
      %760 = vmatprep.subr.mxu0 0.0
      %761 = vmatpush1.msra.mxu0 0.0
      %762 = vmatprep.subr.mxu0 0.0
      %763 = vmatpush1.msra.mxu0 0.0
      %764 = vmatprep.subr.mxu0 0.0
      %765 = vmatpush1.msra.mxu0 0.0
      %766 = vmatprep.subr.mxu0 0.0
      %767 = vmatpush1.msra.mxu0 0.0
      %768 = vmatprep.subr.mxu0 0.0
      %769 = vmatpush1.msra.mxu0 0.0
      %770 = vmatprep.subr.mxu0 0.0
      %771 = vmatpush1.msra.mxu0 0.0
      %772 = vmatprep.subr.mxu0 0.0
      %773 = vmatpush1.msra.mxu0 0.0
      %774 = vmatprep.mubr.f32.mxu0 0.0
      %775 = vmatmul.mubr.f32.gmra.mrb[0].mxu0 %v435
      %v776 = vpop.f32.mrb[0].mxu0
      %v777 = vadd.f32 %v635, %v776
      %v778 = vpop.f32.mrb[0].mxu0
      %v779 = vadd.f32 %v637, %v778
      %780 = vdwg.mxu0
      %781 = vmatprep.subr.mxu0 %v443
      %782 = vmatpush1.msra.mxu0 %v442
      %783 = vmatprep.subr.mxu0 %v447
      %784 = vmatpush1.msra.mxu0 %v446
      %785 = vmatprep.subr.mxu0 %v451
      %786 = vmatpush1.msra.mxu0 %v450
      %787 = vmatprep.subr.mxu0 %v455
      %788 = vmatpush1.msra.mxu0 %v454
      %789 = vmatprep.subr.mxu0 %v459
      %790 = vmatpush1.msra.mxu0 %v458
      %791 = vmatprep.subr.mxu0 %v463
      %792 = vmatpush1.msra.mxu0 %v462
      %793 = vmatprep.subr.mxu0 %v467
      %794 = vmatpush1.msra.mxu0 %v466
      %795 = vmatprep.subr.mxu0 %v471
      %796 = vmatpush1.msra.mxu0 %v470
      %797 = vmatprep.subr.mxu0 %v475
      %798 = vmatpush1.msra.mxu0 %v474
      %799 = vmatprep.subr.mxu0 %v479
      %800 = vmatpush1.msra.mxu0 %v478
      %801 = vmatprep.subr.mxu0 %v483
      %802 = vmatpush1.msra.mxu0 %v482
      %803 = vmatprep.subr.mxu0 %v487
      %804 = vmatpush1.msra.mxu0 %v486
      %805 = vmatprep.subr.mxu0 %v491
      %806 = vmatpush1.msra.mxu0 %v490
      %807 = vmatprep.subr.mxu0 %v495
      %808 = vmatpush1.msra.mxu0 %v494
      %809 = vmatprep.subr.mxu0 %v499
      %810 = vmatpush1.msra.mxu0 %v498
      %811 = vmatprep.subr.mxu0 %v503
      %812 = vmatpush1.msra.mxu0 %v502
      %813 = vmatprep.subr.mxu0 0.0
      %814 = vmatpush1.msra.mxu0 0.0
      %815 = vmatprep.subr.mxu0 0.0
      %816 = vmatpush1.msra.mxu0 0.0
      %817 = vmatprep.subr.mxu0 0.0
      %818 = vmatpush1.msra.mxu0 0.0
      %819 = vmatprep.subr.mxu0 0.0
      %820 = vmatpush1.msra.mxu0 0.0
      %821 = vmatprep.subr.mxu0 0.0
      %822 = vmatpush1.msra.mxu0 0.0
      %823 = vmatprep.subr.mxu0 0.0
      %824 = vmatpush1.msra.mxu0 0.0
      %825 = vmatprep.subr.mxu0 0.0
      %826 = vmatpush1.msra.mxu0 0.0
      %827 = vmatprep.subr.mxu0 0.0
      %828 = vmatpush1.msra.mxu0 0.0
      %829 = vmatprep.subr.mxu0 0.0
      %830 = vmatpush1.msra.mxu0 0.0
      %831 = vmatprep.subr.mxu0 0.0
      %832 = vmatpush1.msra.mxu0 0.0
      %833 = vmatprep.subr.mxu0 0.0
      %834 = vmatpush1.msra.mxu0 0.0
      %835 = vmatprep.subr.mxu0 0.0
      %836 = vmatpush1.msra.mxu0 0.0
      %837 = vmatprep.subr.mxu0 0.0
      %838 = vmatpush1.msra.mxu0 0.0
      %839 = vmatprep.subr.mxu0 0.0
      %840 = vmatpush1.msra.mxu0 0.0
      %841 = vmatprep.subr.mxu0 0.0
      %842 = vmatpush1.msra.mxu0 0.0
      %843 = vmatprep.subr.mxu0 0.0
      %844 = vmatpush1.msra.mxu0 0.0
      %845 = vmatprep.mubr.f32.mxu0 0.0
      %846 = vmatmul.mubr.f32.gmra.mrb[0].mxu0 %v435
      %v847 = vpop.f32.mrb[0].mxu0
      %v848 = vadd.f32 %v706, %v847
      %v849 = vpop.f32.mrb[0].mxu0
      %v850 = vadd.f32 %v708, %v849
      %851 = vdwg.mxu0
      %v852 = vld [vmem:[%s5] sm:$0xf]
      %v854 = vlaneseq
      %v855 = vshrl.u32 %v854, 7
      %v856 = vsub.s32 0, %v855
      %v857 = vrot.slane %v852, %v856
      %v858 = vlaneseq
      %v859 = vshrl.u32 %v858, 7
      %v860 = vsub.s32 1, %v859
      %v861 = vrot.slane %v852, %v860
      %v862 = vlaneseq
      %v863 = vshrl.u32 %v862, 7
      %v864 = vsub.s32 2, %v863
      %v865 = vrot.slane %v852, %v864
      %v866 = vlaneseq
      %v867 = vshrl.u32 %v866, 7
      %v868 = vsub.s32 3, %v867
      %v869 = vrot.slane %v852, %v868
      %v874 = vadd.f32 %v777, %v857
      %v875 = vadd.f32 %v779, %v861
      %v876 = vadd.f32 %v848, %v865
      %v877 = vadd.f32 %v850, %v869
      %v878 = vxor.u32 %v874, 2147483648
      %v879 = vmul.f32 %v878, 1.442695
      %v880 = vpow.pop %v879
      %v881 = vadd.f32 %v880, 1.0
      %v882 = vrcp.pop %v881
      %v883 = vmul.f32 1.0, %v882
      %v884 = vxor.u32 %v875, 2147483648
      %v885 = vmul.f32 %v884, 1.442695
      %v886 = vpow.pop %v885
      %v887 = vadd.f32 %v886, 1.0
      %v888 = vrcp.pop %v887
      %v889 = vmul.f32 1.0, %v888
      %v890 = vtanh.pop %v876
      %v891 = vxor.u32 %v877, 2147483648
      %v892 = vmul.f32 %v891, 1.442695
      %v893 = vpow.pop %v892
      %v894 = vadd.f32 %v893, 1.0
      %v895 = vrcp.pop %v894
      %v896 = vmul.f32 1.0, %v895
      %v897 = vmul.f32 %v889, %v439
      %v898 = vmul.f32 %v883, %v890
      %v899 = vadd.f32 %v897, %v898
      %v900 = vtanh.pop %v899
      %v901 = vmul.f32 %v896, %v900
      %902 = vst [vmem:[#allocation2] sm:$0xff] %v901
      %903 = vst [vmem:[#allocation3] sm:$0xff] %v899
      %v904 = vld [vmem:[%s6] sm:$0xff]
      %v905 = vld [vmem:[%s6 + $0x8] sm:$0xff]
      %v906 = vld [vmem:[%s6 + $0x10] sm:$0xff]
      %v907 = vld [vmem:[%s6 + $0x18] sm:$0xff]
      %v908 = vld [vmem:[%s6 + $0x20] sm:$0xff]
      %v909 = vld [vmem:[%s6 + $0x28] sm:$0xff]
      %v910 = vld [vmem:[%s6 + $0x30] sm:$0xff]
      %v911 = vld [vmem:[%s6 + $0x38] sm:$0xff]
      %v912 = vld [vmem:[%s6 + $0x40] sm:$0xff]
      %v913 = vld [vmem:[%s6 + $0x48] sm:$0xff]
      %v914 = vld [vmem:[%s6 + $0x50] sm:$0xff]
      %v915 = vld [vmem:[%s6 + $0x58] sm:$0xff]
      %v916 = vld [vmem:[%s6 + $0x60] sm:$0xff]
      %v917 = vld [vmem:[%s6 + $0x68] sm:$0xff]
      %v918 = vld [vmem:[%s6 + $0x70] sm:$0xff]
      %v919 = vld [vmem:[%s6 + $0x78] sm:$0xff]
      %v920 = vld [vmem:[%s7] sm:$0x1]
      %v922 = vlaneseq
      %v923 = vshrl.u32 %v922, 7
      %v924 = vsub.s32 0, %v923
      %v925 = vrot.slane %v920, %v924
      %927 = vmatprep.subr.mxu0 0.0
      %928 = vmatpush1.msra.mxu0 %v904
      %929 = vmatprep.subr.mxu0 0.0
      %930 = vmatpush1.msra.mxu0 %v905
      %931 = vmatprep.subr.mxu0 0.0
      %932 = vmatpush1.msra.mxu0 %v906
      %933 = vmatprep.subr.mxu0 0.0
      %934 = vmatpush1.msra.mxu0 %v907
      %935 = vmatprep.subr.mxu0 0.0
      %936 = vmatpush1.msra.mxu0 %v908
      %937 = vmatprep.subr.mxu0 0.0
      %938 = vmatpush1.msra.mxu0 %v909
      %939 = vmatprep.subr.mxu0 0.0
      %940 = vmatpush1.msra.mxu0 %v910
      %941 = vmatprep.subr.mxu0 0.0
      %942 = vmatpush1.msra.mxu0 %v911
      %943 = vmatprep.subr.mxu0 0.0
      %944 = vmatpush1.msra.mxu0 %v912
      %945 = vmatprep.subr.mxu0 0.0
      %946 = vmatpush1.msra.mxu0 %v913
      %947 = vmatprep.subr.mxu0 0.0
      %948 = vmatpush1.msra.mxu0 %v914
      %949 = vmatprep.subr.mxu0 0.0
      %950 = vmatpush1.msra.mxu0 %v915
      %951 = vmatprep.subr.mxu0 0.0
      %952 = vmatpush1.msra.mxu0 %v916
      %953 = vmatprep.subr.mxu0 0.0
      %954 = vmatpush1.msra.mxu0 %v917
      %955 = vmatprep.subr.mxu0 0.0
      %956 = vmatpush1.msra.mxu0 %v918
      %957 = vmatprep.subr.mxu0 0.0
      %958 = vmatpush1.msra.mxu0 %v919
      %959 = vmatprep.subr.mxu0 0.0
      %960 = vmatpush1.msra.mxu0 0.0
      %961 = vmatprep.subr.mxu0 0.0
      %962 = vmatpush1.msra.mxu0 0.0
      %963 = vmatprep.subr.mxu0 0.0
      %964 = vmatpush1.msra.mxu0 0.0
      %965 = vmatprep.subr.mxu0 0.0
      %966 = vmatpush1.msra.mxu0 0.0
      %967 = vmatprep.subr.mxu0 0.0
      %968 = vmatpush1.msra.mxu0 0.0
      %969 = vmatprep.subr.mxu0 0.0
      %970 = vmatpush1.msra.mxu0 0.0
      %971 = vmatprep.subr.mxu0 0.0
      %972 = vmatpush1.msra.mxu0 0.0
      %973 = vmatprep.subr.mxu0 0.0
      %974 = vmatpush1.msra.mxu0 0.0
      %975 = vmatprep.subr.mxu0 0.0
      %976 = vmatpush1.msra.mxu0 0.0
      %977 = vmatprep.subr.mxu0 0.0
      %978 = vmatpush1.msra.mxu0 0.0
      %979 = vmatprep.subr.mxu0 0.0
      %980 = vmatpush1.msra.mxu0 0.0
      %981 = vmatprep.subr.mxu0 0.0
      %982 = vmatpush1.msra.mxu0 0.0
      %983 = vmatprep.subr.mxu0 0.0
      %984 = vmatpush1.msra.mxu0 0.0
      %985 = vmatprep.subr.mxu0 0.0
      %986 = vmatpush1.msra.mxu0 0.0
      %987 = vmatprep.subr.mxu0 0.0
      %988 = vmatpush1.msra.mxu0 0.0
      %989 = vmatprep.subr.mxu0 0.0
      %990 = vmatpush1.msra.mxu0 0.0
      %991 = vmatprep.mubr.f32.mxu0 0.0
      %992 = vmatmul.mubr.f32.gmra.mrb[0].mxu0 %v901
      %v993 = vpop.f32.mrb[0].mxu0
      %v994 = vadd.f32 %v925, %v993
      %v995 = vpop.f32.mrb[0].mxu0
      %996 = vdwg.mxu0
      %997 = vst [vmem:[%s334] sm:$0xff] %v994
      %v998 = vcvt.s32.f32 %v355
      %999 = vmax.xlane.f32.xlu0 %v994
      %v1000 = vpop.xlane.xlu0 %999
      %vm1001 = vcmp.eq.f32.partialorder %v994, %v1000
      %v1002 = vsel %vm1001, %v998, 128.0
      %1003 = vmin.xlane.f32.xlu0 %v1002
      %v1004 = vpop.xlane.xlu0 %1003
      %v1005 = vcvt.f32.s32.to.zero.pseudo %v1004
      %vm1006 = vcmask 7168
      %1007 = vst.msk [vmem:[#allocation4] sm:$0xff] %vm1006, %v1005
      %p1008 = scmp.lt.s32.totalorder %s27, 6
      %s1009 = scalar_select %p1008, %s27, 6
      %s1010 = smul.addr %s1009, 8
      %s1011 = scalar_lea.vmem %s10, %s1010
      // Predicated region
      $region61: #{seq2seq_forward.3} parent=55 // pred_check
        %p1012 = pneg %p239
      $region62: #{seq2seq_forward.3} parent=55 // pred_check_branch
        %1014 = sbr.rel (%p1012) target = $region64
      $region63: #{seq2seq_forward.3} parent=55 // pred_region
        _
      $region64: #{seq2seq_forward.3} parent=55 // pred_fallthru
        _
    $region56: #{seq2seq_forward.3} parent=5 // pred_fallthru
      _
    %p1015 = scmp.le.s32.totalorder 2, %s22
    // Predicated region
    $region65: #{seq2seq_forward.3} parent=5 // pred_check
      %p1016 = pneg %p1015
    $region66: #{seq2seq_forward.3} parent=5 // pred_check_branch
      %1018 = sbr.rel (%p1016) target = $region68
    $region67: #{seq2seq_forward.3} parent=5 // pred_region
      %s1019 = ssub.s32 %s22, 2
      // Predicated region
      $region69: #{seq2seq_forward.3} parent=67 // pred_check
        %p1020 = pneg %p245
      $region70: #{seq2seq_forward.3} parent=67 // pred_check_branch
        %1022 = sbr.rel (%p1020) target = $region72
      $region71: #{seq2seq_forward.3} parent=67 // pred_region
        %p1023 = scmp.lt.s32.totalorder %s28, 6
        %s1024 = scalar_select %p1023, %s28, 6
        %s1025 = smul.addr %s1024, 8
        %s1026 = scalar_lea.vmem %s10, %s1025
      $region72: #{seq2seq_forward.3} parent=67 // pred_fallthru
        _
    $region68: #{seq2seq_forward.3} parent=5 // pred_fallthru
      _
  $region6: #{seq2seq_forward.3} parent=0 // loop_footer
    %s26 = sadd.s32 1, %s22
  $region7: #{seq2seq_forward.3} parent=0 // loop_footer_branch
    %21 = sbr.rel target = $region3
  $region8: #{seq2seq_forward.3} parent=0 // loop_exit
    _

</llo_original>
